<compile_context>
chip_gen: v7x
topology: tpu7x:2x2x1
jax: 0.10.0
libtpu: 0.0.40
codegen_flags: <defaults>
</compile_context>

<pallas_src>
import functools

import jax
import jax.numpy as jnp
from jax import lax
from jax.experimental import pallas as pl
from jax.experimental.pallas import tpu as pltpu


def _se_kernel(x_ref, w1t_ref, w2_ref, wc_ref, o_ref, *, H, W):
    # x_ref  : (B, C, H*W) VMEM, lane-dense
    # w1t_ref: (C, Cs)     VMEM  (conv1 weight, pre-transposed: w1.T)
    # w2_ref : (C, Cs)     VMEM  (conv2 weight, original (C, Cs) layout)
    # wc_ref : (49,)       SMEM  (7x7 conv weight, flattened row-major)
    # o_ref  : (B, C, H*W) VMEM
    B, C, HW = x_ref.shape
    x = x_ref[...].astype(jnp.float32)                            # (B, C, HW)

    # ---- SE branch: global avg pool -> 1x1 -> ReLU -> 1x1 -> sigmoid (VPU only)
    pooled = jnp.mean(x, axis=2, keepdims=True)                   # (B, C, 1)
    w1t = w1t_ref[...].astype(jnp.float32)                        # (C, Cs)
    w2 = w2_ref[...].astype(jnp.float32)                          # (C, Cs)
    h = jnp.sum(w1t[None, :, :] * pooled, axis=1, keepdims=True)  # (B, 1, Cs)
    h = jnp.maximum(h, 0.0)
    g = jax.nn.sigmoid(
        jnp.sum(w2[None, :, :] * h, axis=2, keepdims=True))       # (B, C, 1)
    x_se = x * g                                                  # (B, C, HW)

    # ---- spatial attention: channel mean -> 7x7 conv (pad 3) -> sigmoid
    m_flat = jnp.mean(x_se, axis=1)                               # (B, HW) f32

    # 49 kernel-weight scalar reads hoisted out of the tap loop.
    wts = [wc_ref[t] for t in range(49)]

    for b in range(B):   # B is a small static block size; unrolled at trace time
        m_row = m_flat[b:b + 1, :]                                # (1, HW)
        # Re-view (1, H*W) as (H, W): slice + concat (robust lowering).
        m2 = jnp.concatenate(
            [m_row[:, h0 * W:(h0 + 1) * W] for h0 in range(H)], axis=0)   # (H, W)

        # Zero-pad once per map to (H+6, W+6); explicit f32.
        zr = jnp.zeros((3, W), jnp.float32)
        zc = jnp.zeros((H + 6, 3), jnp.float32)
        mp = jnp.concatenate(
            [zc, jnp.concatenate([zr, m2, zr], axis=0), zc], axis=1)      # (H+6, W+6)

        # 7 column (lane) shifts hoisted out of the 49-tap loop.
        cols = [mp[:, dj:dj + W] for dj in range(7)]              # each (H+6, W)

        # 49 taps, 4 independent accumulators to break the serial add chain.
        accs = [jnp.zeros((H, W), jnp.float32) for _ in range(4)]
        t = 0
        for di in range(7):
            for dj in range(7):
                accs[t % 4] = accs[t % 4] + wts[di * 7 + dj] * cols[dj][di:di + H, :]
                t += 1
        conv = (accs[0] + accs[1]) + (accs[2] + accs[3])
        a2 = jax.nn.sigmoid(conv)                                 # (H, W)

        # Back to lane-dense (1, H*W).
        a_row = jnp.concatenate(
            [a2[h0:h0 + 1, :] for h0 in range(H)], axis=1)        # (1, HW)

        # Lane-dense store of the gated features for this batch element.
        o_ref[b] = (x_se[b] * a_row).astype(o_ref.dtype)


def _pick_b_blk(N, C, HW, itemsize, budget_bytes=4 << 20):
    """Batch block: keep double-buffered in+out blocks within budget, keep the
    unrolled per-sample conv loop short, and keep >= 2 grid steps if possible."""
    per_b = max(1, C * HW * itemsize)
    b = max(1, min(N, budget_bytes // (4 * per_b), 8))
    if N >= 2:
        b = min(b, max(1, N // 2))
    while N % b:
        b -= 1
    return int(b)


def se_module(x, w1, w2, wc, *, b_blk=None):
    """SEModule forward. x: (N,C,H,W); w1: (C//sq, C); w2: (C, C//sq); wc: (7,7)."""
    N, C, H, W = x.shape
    HW = H * W
    Cs = w1.shape[0]
    if b_blk is None:
        b_blk = _pick_b_blk(N, C, HW, x.dtype.itemsize)
    assert N % b_blk == 0

    x2 = x.reshape(N, C, HW)                 # lane-dense view (free in XLA)
    w1t = jnp.transpose(w1)                  # (C, Cs): no in-kernel transpose
    wcf = wc.reshape(49).astype(jnp.float32)

    kernel = functools.partial(_se_kernel, H=H, W=W)
    out2 = pl.pallas_call(
        kernel,
        out_shape=jax.ShapeDtypeStruct((N, C, HW), x.dtype),
        grid=(N // b_blk,),
        in_specs=[
            pl.BlockSpec((b_blk, C, HW), lambda n: (n, 0, 0)),
            pl.BlockSpec((C, Cs), lambda n: (0, 0)),
            pl.BlockSpec((C, Cs), lambda n: (0, 0)),
            pl.BlockSpec(memory_space=pltpu.MemorySpace.SMEM),
        ],
        out_specs=pl.BlockSpec((b_blk, C, HW), lambda n: (n, 0, 0)),
        compiler_params=pltpu.CompilerParams(
            dimension_semantics=("parallel",),
            vmem_limit_bytes=32 * 1024 * 1024,   # safe on v5e/v6e/v7x
        ),
    )(x2, w1t, w2, wcf)
    return out2.reshape(N, C, H, W)


def se_module_ref(x, w1, w2, wc):
    """Pure-JAX reference mirroring the PyTorch forward."""
    pooled = x.mean(axis=(2, 3))                                   # (N, C)
    h = jnp.maximum(pooled @ w1.T, 0.0)                            # (N, Cs)
    g = jax.nn.sigmoid(h @ w2.T)                                   # (N, C)
    x_se = x * g[:, :, None, None]
    m = x_se.mean(axis=1, keepdims=True)                           # (N, 1, H, W)
    conv = lax.conv_general_dilated(
        m, wc.reshape(1, 1, 7, 7), window_strides=(1, 1),
        padding=[(3, 3), (3, 3)],
        dimension_numbers=("NCHW", "OIHW", "NCHW"))
    return x_se * jax.nn.sigmoid(conv)


if __name__ == "__main__":
    # SEModule(dim=4, sqrate=2) on a (2, 4, 16, 16) input.
    N, C, H, W = 2, 4, 16, 16
    Cs = C // 2

    key = jax.random.PRNGKey(0)
    kx, k1, k2, kc = jax.random.split(key, 4)
    x = jax.random.normal(kx, (N, C, H, W), dtype=jnp.float32)
    w1 = jax.random.normal(k1, (Cs, C), dtype=jnp.float32) * 0.5   # conv1 (Cs,C,1,1)
    w2 = jax.random.normal(k2, (C, Cs), dtype=jnp.float32) * 0.5   # conv2 (C,Cs,1,1)
    wc = jax.random.normal(kc, (7, 7), dtype=jnp.float32) * 0.1    # conv  (1,1,7,7)

    out = jax.block_until_ready(se_module(x, w1, w2, wc))
    ref = jax.block_until_ready(se_module_ref(x, w1, w2, wc))
    assert out.shape == (N, C, H, W)
    assert jnp.allclose(out, ref, atol=1e-5, rtol=1e-5), "f32 mismatch vs reference"

    # bf16-in-HBM path (halves memory traffic on v6e/v7x); compute stays f32.
    xb = x.astype(jnp.bfloat16)
    out_b = jax.block_until_ready(se_module(xb, w1, w2, wc))
    ref_b = se_module_ref(xb.astype(jnp.float32), w1, w2, wc)
    assert out_b.dtype == jnp.bfloat16
    assert jnp.allclose(out_b.astype(jnp.float32), ref_b, atol=3e-2, rtol=3e-2), \
        "bf16 mismatch vs reference"

    print("KERNEL_OK")
</pallas_src>

<mosaic_0001>
module attributes {stable_mosaic.version = 11 : i64} {
  func.func @_se_kernel(%arg0: i32, %arg1: memref<1x4x256xf32, #tpu.memory_space<vmem>>, %arg2: memref<4x2xf32, #tpu.memory_space<vmem>>, %arg3: memref<4x2xf32, #tpu.memory_space<vmem>>, %arg4: memref<49xf32, #tpu.memory_space<smem>>, %arg5: memref<1x4x256xf32, #tpu.memory_space<vmem>>) attributes {dimension_semantics = [#tpu.dimension_semantics<parallel>], iteration_bounds = array<i64: 2>, scalar_prefetch = 0 : i64, scratch_operands = 0 : i64, tpu.core_type = #tpu.core_type<tc>, window_params = [{transform_indices = @transform_0, window_bounds = array<i64: 1, 4, 256>}, {pipeline_mode = #tpu.pipeline_mode<synchronous>, transform_indices = @transform_1, window_bounds = array<i64: 4, 2>}, {pipeline_mode = #tpu.pipeline_mode<synchronous>, transform_indices = @transform_2, window_bounds = array<i64: 4, 2>}, {transform_indices = @transform_3, window_bounds = array<i64: 49>}, {transform_indices = @transform_4, window_bounds = array<i64: 1, 4, 256>}]} {
    %c0 = arith.constant 0 : index
    %c0_0 = arith.constant 0 : index
    %c0_1 = arith.constant 0 : index
    %0 = vector.load %arg1[%c0, %c0_0, %c0_1] : memref<1x4x256xf32, #tpu.memory_space<vmem>>, vector<1x4x256xf32>
    %cst = arith.constant dense<0.000000e+00> : vector<1x4xf32>
    %1 = vector.multi_reduction <add>, %0, %cst [2] : vector<1x4x256xf32> to vector<1x4xf32>
    %2 = vector.shape_cast %1 : vector<1x4xf32> to vector<1x4x1xf32>
    %cst_2 = arith.constant 2.560000e+02 : f32
    %3 = vector.broadcast %cst_2 : f32 to vector<1x4x1xf32>
    %4 = arith.divf %2, %3 : vector<1x4x1xf32>
    %c0_3 = arith.constant 0 : index
    %c0_4 = arith.constant 0 : index
    %5 = vector.load %arg2[%c0_3, %c0_4] : memref<4x2xf32, #tpu.memory_space<vmem>>, vector<4x2xf32>
    %c0_5 = arith.constant 0 : index
    %c0_6 = arith.constant 0 : index
    %6 = vector.load %arg3[%c0_5, %c0_6] : memref<4x2xf32, #tpu.memory_space<vmem>>, vector<4x2xf32>
    %7 = vector.shape_cast %5 : vector<4x2xf32> to vector<1x4x2xf32>
    %8 = vector.broadcast %4 : vector<1x4x1xf32> to vector<1x4x2xf32>
    %9 = arith.mulf %7, %8 : vector<1x4x2xf32>
    %cst_7 = arith.constant dense<0.000000e+00> : vector<1x2xf32>
    %10 = vector.multi_reduction <add>, %9, %cst_7 [1] : vector<1x4x2xf32> to vector<1x2xf32>
    %11 = vector.shape_cast %10 : vector<1x2xf32> to vector<1x1x2xf32>
    %cst_8 = arith.constant 0.000000e+00 : f32
    %12 = vector.broadcast %cst_8 : f32 to vector<1x1x2xf32>
    %13 = arith.maximumf %11, %12 : vector<1x1x2xf32>
    %14 = vector.shape_cast %6 : vector<4x2xf32> to vector<1x4x2xf32>
    %15 = vector.broadcast %13 : vector<1x1x2xf32> to vector<1x4x2xf32>
    %16 = arith.mulf %14, %15 : vector<1x4x2xf32>
    %cst_9 = arith.constant dense<0.000000e+00> : vector<1x4xf32>
    %17 = vector.multi_reduction <add>, %16, %cst_9 [2] : vector<1x4x2xf32> to vector<1x4xf32>
    %18 = vector.shape_cast %17 : vector<1x4xf32> to vector<1x4x1xf32>
    %19 = arith.negf %18 : vector<1x4x1xf32>
    %20 = math.exp %19 : vector<1x4x1xf32>
    %cst_10 = arith.constant 1.000000e+00 : f32
    %21 = vector.broadcast %cst_10 : f32 to vector<1x4x1xf32>
    %22 = arith.addf %21, %20 : vector<1x4x1xf32>
    %23 = arith.divf %21, %22 : vector<1x4x1xf32>
    %24 = vector.broadcast %23 : vector<1x4x1xf32> to vector<1x4x256xf32>
    %25 = arith.mulf %0, %24 : vector<1x4x256xf32>
    %cst_11 = arith.constant dense<0.000000e+00> : vector<1x256xf32>
    %26 = vector.multi_reduction <add>, %25, %cst_11 [1] : vector<1x4x256xf32> to vector<1x256xf32>
    %cst_12 = arith.constant 4.000000e+00 : f32
    %27 = vector.broadcast %cst_12 : f32 to vector<1x256xf32>
    %28 = arith.divf %26, %27 : vector<1x256xf32>
    %c0_13 = arith.constant 0 : index
    %29 = memref.load %arg4[%c0_13] : memref<49xf32, #tpu.memory_space<smem>>
    %c1 = arith.constant 1 : index
    %30 = memref.load %arg4[%c1] : memref<49xf32, #tpu.memory_space<smem>>
    %c2 = arith.constant 2 : index
    %31 = memref.load %arg4[%c2] : memref<49xf32, #tpu.memory_space<smem>>
    %c3 = arith.constant 3 : index
    %32 = memref.load %arg4[%c3] : memref<49xf32, #tpu.memory_space<smem>>
    %c4 = arith.constant 4 : index
    %33 = memref.load %arg4[%c4] : memref<49xf32, #tpu.memory_space<smem>>
    %c5 = arith.constant 5 : index
    %34 = memref.load %arg4[%c5] : memref<49xf32, #tpu.memory_space<smem>>
    %c6 = arith.constant 6 : index
    %35 = memref.load %arg4[%c6] : memref<49xf32, #tpu.memory_space<smem>>
    %c7 = arith.constant 7 : index
    %36 = memref.load %arg4[%c7] : memref<49xf32, #tpu.memory_space<smem>>
    %c8 = arith.constant 8 : index
    %37 = memref.load %arg4[%c8] : memref<49xf32, #tpu.memory_space<smem>>
    %c9 = arith.constant 9 : index
    %38 = memref.load %arg4[%c9] : memref<49xf32, #tpu.memory_space<smem>>
    %c10 = arith.constant 10 : index
    %39 = memref.load %arg4[%c10] : memref<49xf32, #tpu.memory_space<smem>>
    %c11 = arith.constant 11 : index
    %40 = memref.load %arg4[%c11] : memref<49xf32, #tpu.memory_space<smem>>
    %c12 = arith.constant 12 : index
    %41 = memref.load %arg4[%c12] : memref<49xf32, #tpu.memory_space<smem>>
    %c13 = arith.constant 13 : index
    %42 = memref.load %arg4[%c13] : memref<49xf32, #tpu.memory_space<smem>>
    %c14 = arith.constant 14 : index
    %43 = memref.load %arg4[%c14] : memref<49xf32, #tpu.memory_space<smem>>
    %c15 = arith.constant 15 : index
    %44 = memref.load %arg4[%c15] : memref<49xf32, #tpu.memory_space<smem>>
    %c16 = arith.constant 16 : index
    %45 = memref.load %arg4[%c16] : memref<49xf32, #tpu.memory_space<smem>>
    %c17 = arith.constant 17 : index
    %46 = memref.load %arg4[%c17] : memref<49xf32, #tpu.memory_space<smem>>
    %c18 = arith.constant 18 : index
    %47 = memref.load %arg4[%c18] : memref<49xf32, #tpu.memory_space<smem>>
    %c19 = arith.constant 19 : index
    %48 = memref.load %arg4[%c19] : memref<49xf32, #tpu.memory_space<smem>>
    %c20 = arith.constant 20 : index
    %49 = memref.load %arg4[%c20] : memref<49xf32, #tpu.memory_space<smem>>
    %c21 = arith.constant 21 : index
    %50 = memref.load %arg4[%c21] : memref<49xf32, #tpu.memory_space<smem>>
    %c22 = arith.constant 22 : index
    %51 = memref.load %arg4[%c22] : memref<49xf32, #tpu.memory_space<smem>>
    %c23 = arith.constant 23 : index
    %52 = memref.load %arg4[%c23] : memref<49xf32, #tpu.memory_space<smem>>
    %c24 = arith.constant 24 : index
    %53 = memref.load %arg4[%c24] : memref<49xf32, #tpu.memory_space<smem>>
    %c25 = arith.constant 25 : index
    %54 = memref.load %arg4[%c25] : memref<49xf32, #tpu.memory_space<smem>>
    %c26 = arith.constant 26 : index
    %55 = memref.load %arg4[%c26] : memref<49xf32, #tpu.memory_space<smem>>
    %c27 = arith.constant 27 : index
    %56 = memref.load %arg4[%c27] : memref<49xf32, #tpu.memory_space<smem>>
    %c28 = arith.constant 28 : index
    %57 = memref.load %arg4[%c28] : memref<49xf32, #tpu.memory_space<smem>>
    %c29 = arith.constant 29 : index
    %58 = memref.load %arg4[%c29] : memref<49xf32, #tpu.memory_space<smem>>
    %c30 = arith.constant 30 : index
    %59 = memref.load %arg4[%c30] : memref<49xf32, #tpu.memory_space<smem>>
    %c31 = arith.constant 31 : index
    %60 = memref.load %arg4[%c31] : memref<49xf32, #tpu.memory_space<smem>>
    %c32 = arith.constant 32 : index
    %61 = memref.load %arg4[%c32] : memref<49xf32, #tpu.memory_space<smem>>
    %c33 = arith.constant 33 : index
    %62 = memref.load %arg4[%c33] : memref<49xf32, #tpu.memory_space<smem>>
    %c34 = arith.constant 34 : index
    %63 = memref.load %arg4[%c34] : memref<49xf32, #tpu.memory_space<smem>>
    %c35 = arith.constant 35 : index
    %64 = memref.load %arg4[%c35] : memref<49xf32, #tpu.memory_space<smem>>
    %c36 = arith.constant 36 : index
    %65 = memref.load %arg4[%c36] : memref<49xf32, #tpu.memory_space<smem>>
    %c37 = arith.constant 37 : index
    %66 = memref.load %arg4[%c37] : memref<49xf32, #tpu.memory_space<smem>>
    %c38 = arith.constant 38 : index
    %67 = memref.load %arg4[%c38] : memref<49xf32, #tpu.memory_space<smem>>
    %c39 = arith.constant 39 : index
    %68 = memref.load %arg4[%c39] : memref<49xf32, #tpu.memory_space<smem>>
    %c40 = arith.constant 40 : index
    %69 = memref.load %arg4[%c40] : memref<49xf32, #tpu.memory_space<smem>>
    %c41 = arith.constant 41 : index
    %70 = memref.load %arg4[%c41] : memref<49xf32, #tpu.memory_space<smem>>
    %c42 = arith.constant 42 : index
    %71 = memref.load %arg4[%c42] : memref<49xf32, #tpu.memory_space<smem>>
    %c43 = arith.constant 43 : index
    %72 = memref.load %arg4[%c43] : memref<49xf32, #tpu.memory_space<smem>>
    %c44 = arith.constant 44 : index
    %73 = memref.load %arg4[%c44] : memref<49xf32, #tpu.memory_space<smem>>
    %c45 = arith.constant 45 : index
    %74 = memref.load %arg4[%c45] : memref<49xf32, #tpu.memory_space<smem>>
    %c46 = arith.constant 46 : index
    %75 = memref.load %arg4[%c46] : memref<49xf32, #tpu.memory_space<smem>>
    %c47 = arith.constant 47 : index
    %76 = memref.load %arg4[%c47] : memref<49xf32, #tpu.memory_space<smem>>
    %c48 = arith.constant 48 : index
    %77 = memref.load %arg4[%c48] : memref<49xf32, #tpu.memory_space<smem>>
    %78 = vector.extract_strided_slice %28 {offsets = [0, 0], sizes = [1, 16], strides = [1, 1]} : vector<1x256xf32> to vector<1x16xf32>
    %79 = vector.extract_strided_slice %28 {offsets = [0, 16], sizes = [1, 16], strides = [1, 1]} : vector<1x256xf32> to vector<1x16xf32>
    %80 = vector.extract_strided_slice %28 {offsets = [0, 32], sizes = [1, 16], strides = [1, 1]} : vector<1x256xf32> to vector<1x16xf32>
    %81 = vector.extract_strided_slice %28 {offsets = [0, 48], sizes = [1, 16], strides = [1, 1]} : vector<1x256xf32> to vector<1x16xf32>
    %82 = vector.extract_strided_slice %28 {offsets = [0, 64], sizes = [1, 16], strides = [1, 1]} : vector<1x256xf32> to vector<1x16xf32>
    %83 = vector.extract_strided_slice %28 {offsets = [0, 80], sizes = [1, 16], strides = [1, 1]} : vector<1x256xf32> to vector<1x16xf32>
    %84 = vector.extract_strided_slice %28 {offsets = [0, 96], sizes = [1, 16], strides = [1, 1]} : vector<1x256xf32> to vector<1x16xf32>
    %85 = vector.extract_strided_slice %28 {offsets = [0, 112], sizes = [1, 16], strides = [1, 1]} : vector<1x256xf32> to vector<1x16xf32>
    %86 = vector.extract_strided_slice %28 {offsets = [0, 128], sizes = [1, 16], strides = [1, 1]} : vector<1x256xf32> to vector<1x16xf32>
    %87 = vector.extract_strided_slice %28 {offsets = [0, 144], sizes = [1, 16], strides = [1, 1]} : vector<1x256xf32> to vector<1x16xf32>
    %88 = vector.extract_strided_slice %28 {offsets = [0, 160], sizes = [1, 16], strides = [1, 1]} : vector<1x256xf32> to vector<1x16xf32>
    %89 = vector.extract_strided_slice %28 {offsets = [0, 176], sizes = [1, 16], strides = [1, 1]} : vector<1x256xf32> to vector<1x16xf32>
    %90 = vector.extract_strided_slice %28 {offsets = [0, 192], sizes = [1, 16], strides = [1, 1]} : vector<1x256xf32> to vector<1x16xf32>
    %91 = vector.extract_strided_slice %28 {offsets = [0, 208], sizes = [1, 16], strides = [1, 1]} : vector<1x256xf32> to vector<1x16xf32>
    %92 = vector.extract_strided_slice %28 {offsets = [0, 224], sizes = [1, 16], strides = [1, 1]} : vector<1x256xf32> to vector<1x16xf32>
    %93 = vector.extract_strided_slice %28 {offsets = [0, 240], sizes = [1, 16], strides = [1, 1]} : vector<1x256xf32> to vector<1x16xf32>
    %94 = tpu.concatenate %78, %79, %80, %81, %82, %83, %84, %85, %86, %87, %88, %89, %90, %91, %92, %93 in 0 : vector<1x16xf32>, vector<1x16xf32>, vector<1x16xf32>, vector<1x16xf32>, vector<1x16xf32>, vector<1x16xf32>, vector<1x16xf32>, vector<1x16xf32>, vector<1x16xf32>, vector<1x16xf32>, vector<1x16xf32>, vector<1x16xf32>, vector<1x16xf32>, vector<1x16xf32>, vector<1x16xf32>, vector<1x16xf32> -> vector<16x16xf32>
    %cst_14 = arith.constant 0.000000e+00 : f32
    %95 = vector.broadcast %cst_14 : f32 to vector<3x16xf32>
    %cst_15 = arith.constant 0.000000e+00 : f32
    %96 = vector.broadcast %cst_15 : f32 to vector<22x3xf32>
    %97 = tpu.concatenate %95, %94, %95 in 0 : vector<3x16xf32>, vector<16x16xf32>, vector<3x16xf32> -> vector<22x16xf32>
    %98 = tpu.concatenate %96, %97, %96 in 1 : vector<22x3xf32>, vector<22x16xf32>, vector<22x3xf32> -> vector<22x22xf32>
    %99 = vector.extract_strided_slice %98 {offsets = [0, 0], sizes = [22, 16], strides = [1, 1]} : vector<22x22xf32> to vector<22x16xf32>
    %100 = vector.extract_strided_slice %98 {offsets = [0, 1], sizes = [22, 16], strides = [1, 1]} : vector<22x22xf32> to vector<22x16xf32>
    %101 = vector.extract_strided_slice %98 {offsets = [0, 2], sizes = [22, 16], strides = [1, 1]} : vector<22x22xf32> to vector<22x16xf32>
    %102 = vector.extract_strided_slice %98 {offsets = [0, 3], sizes = [22, 16], strides = [1, 1]} : vector<22x22xf32> to vector<22x16xf32>
    %103 = vector.extract_strided_slice %98 {offsets = [0, 4], sizes = [22, 16], strides = [1, 1]} : vector<22x22xf32> to vector<22x16xf32>
    %104 = vector.extract_strided_slice %98 {offsets = [0, 5], sizes = [22, 16], strides = [1, 1]} : vector<22x22xf32> to vector<22x16xf32>
    %105 = vector.extract_strided_slice %98 {offsets = [0, 6], sizes = [22, 16], strides = [1, 1]} : vector<22x22xf32> to vector<22x16xf32>
    %cst_16 = arith.constant 0.000000e+00 : f32
    %106 = vector.broadcast %cst_16 : f32 to vector<16x16xf32>
    %cst_17 = arith.constant 0.000000e+00 : f32
    %107 = vector.broadcast %cst_17 : f32 to vector<16x16xf32>
    %cst_18 = arith.constant 0.000000e+00 : f32
    %108 = vector.broadcast %cst_18 : f32 to vector<16x16xf32>
    %cst_19 = arith.constant 0.000000e+00 : f32
    %109 = vector.broadcast %cst_19 : f32 to vector<16x16xf32>
    %110 = vector.extract_strided_slice %99 {offsets = [0, 0], sizes = [16, 16], strides = [1, 1]} : vector<22x16xf32> to vector<16x16xf32>
    %111 = vector.broadcast %29 : f32 to vector<16x16xf32>
    %112 = arith.mulf %111, %110 : vector<16x16xf32>
    %113 = arith.addf %106, %112 : vector<16x16xf32>
    %114 = vector.extract_strided_slice %100 {offsets = [0, 0], sizes = [16, 16], strides = [1, 1]} : vector<22x16xf32> to vector<16x16xf32>
    %115 = vector.broadcast %30 : f32 to vector<16x16xf32>
    %116 = arith.mulf %115, %114 : vector<16x16xf32>
    %117 = arith.addf %107, %116 : vector<16x16xf32>
    %118 = vector.extract_strided_slice %101 {offsets = [0, 0], sizes = [16, 16], strides = [1, 1]} : vector<22x16xf32> to vector<16x16xf32>
    %119 = vector.broadcast %31 : f32 to vector<16x16xf32>
    %120 = arith.mulf %119, %118 : vector<16x16xf32>
    %121 = arith.addf %108, %120 : vector<16x16xf32>
    %122 = vector.extract_strided_slice %102 {offsets = [0, 0], sizes = [16, 16], strides = [1, 1]} : vector<22x16xf32> to vector<16x16xf32>
    %123 = vector.broadcast %32 : f32 to vector<16x16xf32>
    %124 = arith.mulf %123, %122 : vector<16x16xf32>
    %125 = arith.addf %109, %124 : vector<16x16xf32>
    %126 = vector.extract_strided_slice %103 {offsets = [0, 0], sizes = [16, 16], strides = [1, 1]} : vector<22x16xf32> to vector<16x16xf32>
    %127 = vector.broadcast %33 : f32 to vector<16x16xf32>
    %128 = arith.mulf %127, %126 : vector<16x16xf32>
    %129 = arith.addf %113, %128 : vector<16x16xf32>
    %130 = vector.extract_strided_slice %104 {offsets = [0, 0], sizes = [16, 16], strides = [1, 1]} : vector<22x16xf32> to vector<16x16xf32>
    %131 = vector.broadcast %34 : f32 to vector<16x16xf32>
    %132 = arith.mulf %131, %130 : vector<16x16xf32>
    %133 = arith.addf %117, %132 : vector<16x16xf32>
    %134 = vector.extract_strided_slice %105 {offsets = [0, 0], sizes = [16, 16], strides = [1, 1]} : vector<22x16xf32> to vector<16x16xf32>
    %135 = vector.broadcast %35 : f32 to vector<16x16xf32>
    %136 = arith.mulf %135, %134 : vector<16x16xf32>
    %137 = arith.addf %121, %136 : vector<16x16xf32>
    %138 = vector.extract_strided_slice %99 {offsets = [1, 0], sizes = [16, 16], strides = [1, 1]} : vector<22x16xf32> to vector<16x16xf32>
    %139 = vector.broadcast %36 : f32 to vector<16x16xf32>
    %140 = arith.mulf %139, %138 : vector<16x16xf32>
    %141 = arith.addf %125, %140 : vector<16x16xf32>
    %142 = vector.extract_strided_slice %100 {offsets = [1, 0], sizes = [16, 16], strides = [1, 1]} : vector<22x16xf32> to vector<16x16xf32>
    %143 = vector.broadcast %37 : f32 to vector<16x16xf32>
    %144 = arith.mulf %143, %142 : vector<16x16xf32>
    %145 = arith.addf %129, %144 : vector<16x16xf32>
    %146 = vector.extract_strided_slice %101 {offsets = [1, 0], sizes = [16, 16], strides = [1, 1]} : vector<22x16xf32> to vector<16x16xf32>
    %147 = vector.broadcast %38 : f32 to vector<16x16xf32>
    %148 = arith.mulf %147, %146 : vector<16x16xf32>
    %149 = arith.addf %133, %148 : vector<16x16xf32>
    %150 = vector.extract_strided_slice %102 {offsets = [1, 0], sizes = [16, 16], strides = [1, 1]} : vector<22x16xf32> to vector<16x16xf32>
    %151 = vector.broadcast %39 : f32 to vector<16x16xf32>
    %152 = arith.mulf %151, %150 : vector<16x16xf32>
    %153 = arith.addf %137, %152 : vector<16x16xf32>
    %154 = vector.extract_strided_slice %103 {offsets = [1, 0], sizes = [16, 16], strides = [1, 1]} : vector<22x16xf32> to vector<16x16xf32>
    %155 = vector.broadcast %40 : f32 to vector<16x16xf32>
    %156 = arith.mulf %155, %154 : vector<16x16xf32>
    %157 = arith.addf %141, %156 : vector<16x16xf32>
    %158 = vector.extract_strided_slice %104 {offsets = [1, 0], sizes = [16, 16], strides = [1, 1]} : vector<22x16xf32> to vector<16x16xf32>
    %159 = vector.broadcast %41 : f32 to vector<16x16xf32>
    %160 = arith.mulf %159, %158 : vector<16x16xf32>
    %161 = arith.addf %145, %160 : vector<16x16xf32>
    %162 = vector.extract_strided_slice %105 {offsets = [1, 0], sizes = [16, 16], strides = [1, 1]} : vector<22x16xf32> to vector<16x16xf32>
    %163 = vector.broadcast %42 : f32 to vector<16x16xf32>
    %164 = arith.mulf %163, %162 : vector<16x16xf32>
    %165 = arith.addf %149, %164 : vector<16x16xf32>
    %166 = vector.extract_strided_slice %99 {offsets = [2, 0], sizes = [16, 16], strides = [1, 1]} : vector<22x16xf32> to vector<16x16xf32>
    %167 = vector.broadcast %43 : f32 to vector<16x16xf32>
    %168 = arith.mulf %167, %166 : vector<16x16xf32>
    %169 = arith.addf %153, %168 : vector<16x16xf32>
    %170 = vector.extract_strided_slice %100 {offsets = [2, 0], sizes = [16, 16], strides = [1, 1]} : vector<22x16xf32> to vector<16x16xf32>
    %171 = vector.broadcast %44 : f32 to vector<16x16xf32>
    %172 = arith.mulf %171, %170 : vector<16x16xf32>
    %173 = arith.addf %157, %172 : vector<16x16xf32>
    %174 = vector.extract_strided_slice %101 {offsets = [2, 0], sizes = [16, 16], strides = [1, 1]} : vector<22x16xf32> to vector<16x16xf32>
    %175 = vector.broadcast %45 : f32 to vector<16x16xf32>
    %176 = arith.mulf %175, %174 : vector<16x16xf32>
    %177 = arith.addf %161, %176 : vector<16x16xf32>
    %178 = vector.extract_strided_slice %102 {offsets = [2, 0], sizes = [16, 16], strides = [1, 1]} : vector<22x16xf32> to vector<16x16xf32>
    %179 = vector.broadcast %46 : f32 to vector<16x16xf32>
    %180 = arith.mulf %179, %178 : vector<16x16xf32>
    %181 = arith.addf %165, %180 : vector<16x16xf32>
    %182 = vector.extract_strided_slice %103 {offsets = [2, 0], sizes = [16, 16], strides = [1, 1]} : vector<22x16xf32> to vector<16x16xf32>
    %183 = vector.broadcast %47 : f32 to vector<16x16xf32>
    %184 = arith.mulf %183, %182 : vector<16x16xf32>
    %185 = arith.addf %169, %184 : vector<16x16xf32>
    %186 = vector.extract_strided_slice %104 {offsets = [2, 0], sizes = [16, 16], strides = [1, 1]} : vector<22x16xf32> to vector<16x16xf32>
    %187 = vector.broadcast %48 : f32 to vector<16x16xf32>
    %188 = arith.mulf %187, %186 : vector<16x16xf32>
    %189 = arith.addf %173, %188 : vector<16x16xf32>
    %190 = vector.extract_strided_slice %105 {offsets = [2, 0], sizes = [16, 16], strides = [1, 1]} : vector<22x16xf32> to vector<16x16xf32>
    %191 = vector.broadcast %49 : f32 to vector<16x16xf32>
    %192 = arith.mulf %191, %190 : vector<16x16xf32>
    %193 = arith.addf %177, %192 : vector<16x16xf32>
    %194 = vector.extract_strided_slice %99 {offsets = [3, 0], sizes = [16, 16], strides = [1, 1]} : vector<22x16xf32> to vector<16x16xf32>
    %195 = vector.broadcast %50 : f32 to vector<16x16xf32>
    %196 = arith.mulf %195, %194 : vector<16x16xf32>
    %197 = arith.addf %181, %196 : vector<16x16xf32>
    %198 = vector.extract_strided_slice %100 {offsets = [3, 0], sizes = [16, 16], strides = [1, 1]} : vector<22x16xf32> to vector<16x16xf32>
    %199 = vector.broadcast %51 : f32 to vector<16x16xf32>
    %200 = arith.mulf %199, %198 : vector<16x16xf32>
    %201 = arith.addf %185, %200 : vector<16x16xf32>
    %202 = vector.extract_strided_slice %101 {offsets = [3, 0], sizes = [16, 16], strides = [1, 1]} : vector<22x16xf32> to vector<16x16xf32>
    %203 = vector.broadcast %52 : f32 to vector<16x16xf32>
    %204 = arith.mulf %203, %202 : vector<16x16xf32>
    %205 = arith.addf %189, %204 : vector<16x16xf32>
    %206 = vector.extract_strided_slice %102 {offsets = [3, 0], sizes = [16, 16], strides = [1, 1]} : vector<22x16xf32> to vector<16x16xf32>
    %207 = vector.broadcast %53 : f32 to vector<16x16xf32>
    %208 = arith.mulf %207, %206 : vector<16x16xf32>
    %209 = arith.addf %193, %208 : vector<16x16xf32>
    %210 = vector.extract_strided_slice %103 {offsets = [3, 0], sizes = [16, 16], strides = [1, 1]} : vector<22x16xf32> to vector<16x16xf32>
    %211 = vector.broadcast %54 : f32 to vector<16x16xf32>
    %212 = arith.mulf %211, %210 : vector<16x16xf32>
    %213 = arith.addf %197, %212 : vector<16x16xf32>
    %214 = vector.extract_strided_slice %104 {offsets = [3, 0], sizes = [16, 16], strides = [1, 1]} : vector<22x16xf32> to vector<16x16xf32>
    %215 = vector.broadcast %55 : f32 to vector<16x16xf32>
    %216 = arith.mulf %215, %214 : vector<16x16xf32>
    %217 = arith.addf %201, %216 : vector<16x16xf32>
    %218 = vector.extract_strided_slice %105 {offsets = [3, 0], sizes = [16, 16], strides = [1, 1]} : vector<22x16xf32> to vector<16x16xf32>
    %219 = vector.broadcast %56 : f32 to vector<16x16xf32>
    %220 = arith.mulf %219, %218 : vector<16x16xf32>
    %221 = arith.addf %205, %220 : vector<16x16xf32>
    %222 = vector.extract_strided_slice %99 {offsets = [4, 0], sizes = [16, 16], strides = [1, 1]} : vector<22x16xf32> to vector<16x16xf32>
    %223 = vector.broadcast %57 : f32 to vector<16x16xf32>
    %224 = arith.mulf %223, %222 : vector<16x16xf32>
    %225 = arith.addf %209, %224 : vector<16x16xf32>
    %226 = vector.extract_strided_slice %100 {offsets = [4, 0], sizes = [16, 16], strides = [1, 1]} : vector<22x16xf32> to vector<16x16xf32>
    %227 = vector.broadcast %58 : f32 to vector<16x16xf32>
    %228 = arith.mulf %227, %226 : vector<16x16xf32>
    %229 = arith.addf %213, %228 : vector<16x16xf32>
    %230 = vector.extract_strided_slice %101 {offsets = [4, 0], sizes = [16, 16], strides = [1, 1]} : vector<22x16xf32> to vector<16x16xf32>
    %231 = vector.broadcast %59 : f32 to vector<16x16xf32>
    %232 = arith.mulf %231, %230 : vector<16x16xf32>
    %233 = arith.addf %217, %232 : vector<16x16xf32>
    %234 = vector.extract_strided_slice %102 {offsets = [4, 0], sizes = [16, 16], strides = [1, 1]} : vector<22x16xf32> to vector<16x16xf32>
    %235 = vector.broadcast %60 : f32 to vector<16x16xf32>
    %236 = arith.mulf %235, %234 : vector<16x16xf32>
    %237 = arith.addf %221, %236 : vector<16x16xf32>
    %238 = vector.extract_strided_slice %103 {offsets = [4, 0], sizes = [16, 16], strides = [1, 1]} : vector<22x16xf32> to vector<16x16xf32>
    %239 = vector.broadcast %61 : f32 to vector<16x16xf32>
    %240 = arith.mulf %239, %238 : vector<16x16xf32>
    %241 = arith.addf %225, %240 : vector<16x16xf32>
    %242 = vector.extract_strided_slice %104 {offsets = [4, 0], sizes = [16, 16], strides = [1, 1]} : vector<22x16xf32> to vector<16x16xf32>
    %243 = vector.broadcast %62 : f32 to vector<16x16xf32>
    %244 = arith.mulf %243, %242 : vector<16x16xf32>
    %245 = arith.addf %229, %244 : vector<16x16xf32>
    %246 = vector.extract_strided_slice %105 {offsets = [4, 0], sizes = [16, 16], strides = [1, 1]} : vector<22x16xf32> to vector<16x16xf32>
    %247 = vector.broadcast %63 : f32 to vector<16x16xf32>
    %248 = arith.mulf %247, %246 : vector<16x16xf32>
    %249 = arith.addf %233, %248 : vector<16x16xf32>
    %250 = vector.extract_strided_slice %99 {offsets = [5, 0], sizes = [16, 16], strides = [1, 1]} : vector<22x16xf32> to vector<16x16xf32>
    %251 = vector.broadcast %64 : f32 to vector<16x16xf32>
    %252 = arith.mulf %251, %250 : vector<16x16xf32>
    %253 = arith.addf %237, %252 : vector<16x16xf32>
    %254 = vector.extract_strided_slice %100 {offsets = [5, 0], sizes = [16, 16], strides = [1, 1]} : vector<22x16xf32> to vector<16x16xf32>
    %255 = vector.broadcast %65 : f32 to vector<16x16xf32>
    %256 = arith.mulf %255, %254 : vector<16x16xf32>
    %257 = arith.addf %241, %256 : vector<16x16xf32>
    %258 = vector.extract_strided_slice %101 {offsets = [5, 0], sizes = [16, 16], strides = [1, 1]} : vector<22x16xf32> to vector<16x16xf32>
    %259 = vector.broadcast %66 : f32 to vector<16x16xf32>
    %260 = arith.mulf %259, %258 : vector<16x16xf32>
    %261 = arith.addf %245, %260 : vector<16x16xf32>
    %262 = vector.extract_strided_slice %102 {offsets = [5, 0], sizes = [16, 16], strides = [1, 1]} : vector<22x16xf32> to vector<16x16xf32>
    %263 = vector.broadcast %67 : f32 to vector<16x16xf32>
    %264 = arith.mulf %263, %262 : vector<16x16xf32>
    %265 = arith.addf %249, %264 : vector<16x16xf32>
    %266 = vector.extract_strided_slice %103 {offsets = [5, 0], sizes = [16, 16], strides = [1, 1]} : vector<22x16xf32> to vector<16x16xf32>
    %267 = vector.broadcast %68 : f32 to vector<16x16xf32>
    %268 = arith.mulf %267, %266 : vector<16x16xf32>
    %269 = arith.addf %253, %268 : vector<16x16xf32>
    %270 = vector.extract_strided_slice %104 {offsets = [5, 0], sizes = [16, 16], strides = [1, 1]} : vector<22x16xf32> to vector<16x16xf32>
    %271 = vector.broadcast %69 : f32 to vector<16x16xf32>
    %272 = arith.mulf %271, %270 : vector<16x16xf32>
    %273 = arith.addf %257, %272 : vector<16x16xf32>
    %274 = vector.extract_strided_slice %105 {offsets = [5, 0], sizes = [16, 16], strides = [1, 1]} : vector<22x16xf32> to vector<16x16xf32>
    %275 = vector.broadcast %70 : f32 to vector<16x16xf32>
    %276 = arith.mulf %275, %274 : vector<16x16xf32>
    %277 = arith.addf %261, %276 : vector<16x16xf32>
    %278 = vector.extract_strided_slice %99 {offsets = [6, 0], sizes = [16, 16], strides = [1, 1]} : vector<22x16xf32> to vector<16x16xf32>
    %279 = vector.broadcast %71 : f32 to vector<16x16xf32>
    %280 = arith.mulf %279, %278 : vector<16x16xf32>
    %281 = arith.addf %265, %280 : vector<16x16xf32>
    %282 = vector.extract_strided_slice %100 {offsets = [6, 0], sizes = [16, 16], strides = [1, 1]} : vector<22x16xf32> to vector<16x16xf32>
    %283 = vector.broadcast %72 : f32 to vector<16x16xf32>
    %284 = arith.mulf %283, %282 : vector<16x16xf32>
    %285 = arith.addf %269, %284 : vector<16x16xf32>
    %286 = vector.extract_strided_slice %101 {offsets = [6, 0], sizes = [16, 16], strides = [1, 1]} : vector<22x16xf32> to vector<16x16xf32>
    %287 = vector.broadcast %73 : f32 to vector<16x16xf32>
    %288 = arith.mulf %287, %286 : vector<16x16xf32>
    %289 = arith.addf %273, %288 : vector<16x16xf32>
    %290 = vector.extract_strided_slice %102 {offsets = [6, 0], sizes = [16, 16], strides = [1, 1]} : vector<22x16xf32> to vector<16x16xf32>
    %291 = vector.broadcast %74 : f32 to vector<16x16xf32>
    %292 = arith.mulf %291, %290 : vector<16x16xf32>
    %293 = arith.addf %277, %292 : vector<16x16xf32>
    %294 = vector.extract_strided_slice %103 {offsets = [6, 0], sizes = [16, 16], strides = [1, 1]} : vector<22x16xf32> to vector<16x16xf32>
    %295 = vector.broadcast %75 : f32 to vector<16x16xf32>
    %296 = arith.mulf %295, %294 : vector<16x16xf32>
    %297 = arith.addf %281, %296 : vector<16x16xf32>
    %298 = vector.extract_strided_slice %104 {offsets = [6, 0], sizes = [16, 16], strides = [1, 1]} : vector<22x16xf32> to vector<16x16xf32>
    %299 = vector.broadcast %76 : f32 to vector<16x16xf32>
    %300 = arith.mulf %299, %298 : vector<16x16xf32>
    %301 = arith.addf %285, %300 : vector<16x16xf32>
    %302 = vector.extract_strided_slice %105 {offsets = [6, 0], sizes = [16, 16], strides = [1, 1]} : vector<22x16xf32> to vector<16x16xf32>
    %303 = vector.broadcast %77 : f32 to vector<16x16xf32>
    %304 = arith.mulf %303, %302 : vector<16x16xf32>
    %305 = arith.addf %289, %304 : vector<16x16xf32>
    %306 = arith.addf %305, %293 : vector<16x16xf32>
    %307 = arith.addf %297, %301 : vector<16x16xf32>
    %308 = arith.addf %306, %307 : vector<16x16xf32>
    %309 = arith.negf %308 : vector<16x16xf32>
    %310 = math.exp %309 : vector<16x16xf32>
    %cst_20 = arith.constant 1.000000e+00 : f32
    %311 = vector.broadcast %cst_20 : f32 to vector<16x16xf32>
    %312 = arith.addf %311, %310 : vector<16x16xf32>
    %313 = arith.divf %311, %312 : vector<16x16xf32>
    %314 = vector.extract_strided_slice %313 {offsets = [0, 0], sizes = [1, 16], strides = [1, 1]} : vector<16x16xf32> to vector<1x16xf32>
    %315 = vector.extract_strided_slice %313 {offsets = [1, 0], sizes = [1, 16], strides = [1, 1]} : vector<16x16xf32> to vector<1x16xf32>
    %316 = vector.extract_strided_slice %313 {offsets = [2, 0], sizes = [1, 16], strides = [1, 1]} : vector<16x16xf32> to vector<1x16xf32>
    %317 = vector.extract_strided_slice %313 {offsets = [3, 0], sizes = [1, 16], strides = [1, 1]} : vector<16x16xf32> to vector<1x16xf32>
    %318 = vector.extract_strided_slice %313 {offsets = [4, 0], sizes = [1, 16], strides = [1, 1]} : vector<16x16xf32> to vector<1x16xf32>
    %319 = vector.extract_strided_slice %313 {offsets = [5, 0], sizes = [1, 16], strides = [1, 1]} : vector<16x16xf32> to vector<1x16xf32>
    %320 = vector.extract_strided_slice %313 {offsets = [6, 0], sizes = [1, 16], strides = [1, 1]} : vector<16x16xf32> to vector<1x16xf32>
    %321 = vector.extract_strided_slice %313 {offsets = [7, 0], sizes = [1, 16], strides = [1, 1]} : vector<16x16xf32> to vector<1x16xf32>
    %322 = vector.extract_strided_slice %313 {offsets = [8, 0], sizes = [1, 16], strides = [1, 1]} : vector<16x16xf32> to vector<1x16xf32>
    %323 = vector.extract_strided_slice %313 {offsets = [9, 0], sizes = [1, 16], strides = [1, 1]} : vector<16x16xf32> to vector<1x16xf32>
    %324 = vector.extract_strided_slice %313 {offsets = [10, 0], sizes = [1, 16], strides = [1, 1]} : vector<16x16xf32> to vector<1x16xf32>
    %325 = vector.extract_strided_slice %313 {offsets = [11, 0], sizes = [1, 16], strides = [1, 1]} : vector<16x16xf32> to vector<1x16xf32>
    %326 = vector.extract_strided_slice %313 {offsets = [12, 0], sizes = [1, 16], strides = [1, 1]} : vector<16x16xf32> to vector<1x16xf32>
    %327 = vector.extract_strided_slice %313 {offsets = [13, 0], sizes = [1, 16], strides = [1, 1]} : vector<16x16xf32> to vector<1x16xf32>
    %328 = vector.extract_strided_slice %313 {offsets = [14, 0], sizes = [1, 16], strides = [1, 1]} : vector<16x16xf32> to vector<1x16xf32>
    %329 = vector.extract_strided_slice %313 {offsets = [15, 0], sizes = [1, 16], strides = [1, 1]} : vector<16x16xf32> to vector<1x16xf32>
    %330 = tpu.concatenate %314, %315, %316, %317, %318, %319, %320, %321, %322, %323, %324, %325, %326, %327, %328, %329 in 1 : vector<1x16xf32>, vector<1x16xf32>, vector<1x16xf32>, vector<1x16xf32>, vector<1x16xf32>, vector<1x16xf32>, vector<1x16xf32>, vector<1x16xf32>, vector<1x16xf32>, vector<1x16xf32>, vector<1x16xf32>, vector<1x16xf32>, vector<1x16xf32>, vector<1x16xf32>, vector<1x16xf32>, vector<1x16xf32> -> vector<1x256xf32>
    %331 = vector.shape_cast %25 : vector<1x4x256xf32> to vector<4x256xf32>
    %332 = vector.broadcast %330 : vector<1x256xf32> to vector<4x256xf32>
    %333 = arith.mulf %331, %332 : vector<4x256xf32>
    %c0_21 = arith.constant 0 : index
    %c0_22 = arith.constant 0 : index
    %c0_23 = arith.constant 0 : index
    %334 = vector.load %arg5[%c0_21, %c0_22, %c0_23] : memref<1x4x256xf32, #tpu.memory_space<vmem>>, vector<1x4x256xf32>
    %335 = vector.shape_cast %334 : vector<1x4x256xf32> to vector<4x256xf32>
    %336 = vector.shape_cast %333 : vector<4x256xf32> to vector<1x4x256xf32>
    tpu.vector_store %arg5[%c0_21, %c0_22, %c0_23], %336 {strides = array<i32>} : memref<1x4x256xf32, #tpu.memory_space<vmem>>, vector<1x4x256xf32>,
    return
  }
  func.func @transform_0(%arg0: i32) -> (i32, i32, i32) {
    %c0_i32 = arith.constant 0 : i32
    %c0_i32_0 = arith.constant 0 : i32
    %c0_i32_1 = arith.constant 0 : i32
    return %arg0, %c0_i32, %c0_i32_0 : i32, i32, i32
  }
  func.func @transform_1(%arg0: i32) -> (i32, i32) {
    %c0_i32 = arith.constant 0 : i32
    %c0_i32_0 = arith.constant 0 : i32
    %c0_i32_1 = arith.constant 0 : i32
    return %c0_i32, %c0_i32_0 : i32, i32
  }
  func.func @transform_2(%arg0: i32) -> (i32, i32) {
    %c0_i32 = arith.constant 0 : i32
    %c0_i32_0 = arith.constant 0 : i32
    %c0_i32_1 = arith.constant 0 : i32
    return %c0_i32, %c0_i32_0 : i32, i32
  }
  func.func @transform_3(%arg0: i32) -> i32 {
    %c0_i32 = arith.constant 0 : i32
    %c0_i32_0 = arith.constant 0 : i32
    return %c0_i32 : i32
  }
  func.func @transform_4(%arg0: i32) -> (i32, i32, i32) {
    %c0_i32 = arith.constant 0 : i32
    %c0_i32_0 = arith.constant 0 : i32
    %c0_i32_1 = arith.constant 0 : i32
    return %arg0, %c0_i32, %c0_i32_0 : i32, i32, i32
  }
}

</mosaic_0001>

<llo_original>
// kernel: tpu_custom_call.1
$region0: #{tpu_custom_call.1}
  #allocation0 [shape = 'u32[]', space=smem, size = 0x4, offset = 0x4, fixed_abs, tag = 'smem constant byte address 0x4 - core index']
  #allocation1 [shape = 'u32[144,128]{1,0:T(1,128)}', space=vmem, size = 0x12000, scoped, tag = 'internal scratch']
  %s0 = inlined_call_operand.hbm [shape: f32[2,4,256], index: 0, kind: input, shape index: {}]
  %s1 = inlined_call_operand.vmem [shape: f32[4,2], index: 1, kind: input, shape index: {}]
  %s2 = inlined_call_operand.vmem [shape: f32[4,2], index: 2, kind: input, shape index: {}]
  %s3 = inlined_call_operand.vmem [shape: f32[49], index: 3, kind: input, shape index: {}]
  %s4 = inlined_call_operand.hbm [shape: f32[2,4,256], index: 4, kind: output, shape index: {}]
  %s5 = sld [smem:[#allocation0]]
  $region57: #{tpu_custom_call.1} parent=0
    _
  %s7 = ssub.s32 1, %s5
  %s8 = scalar_select 0, %s7, %s5
  $region1: #{tpu_custom_call.1} parent=0
    #allocation2 [shape = 'u8[8192]{0}', space=vmem, size = 0x2000, scoped, tag = 'input window, operand 0']
    #allocation3 [shape = 's32[2]{0}', space=sflag, size = 0x8, scoped, tag = 'scoped memory for tpu_custom_call.1']
    #allocation4 [shape = 's32[2]{0}', space=sflag, size = 0x8, scoped, tag = 'scoped memory for tpu_custom_call.1']
    #allocation5 [shape = 's32[2]{0}', space=sflag, size = 0x8, scoped, tag = 'scoped memory for tpu_custom_call.1']
    #allocation6 [shape = 'u8[512]{0}', space=smem, size = 0x200, scoped, tag = 'input window, operand 3, single buffered']
    #allocation7 [shape = 'u8[8192]{0}', space=vmem, size = 0x2000, scoped, tag = 'output window, operand 0']
    %9 = vsyncpa [#allocation3], 0
    %s10 = scalar_lea.sflag [#allocation3], 1
    %11 = vsyncpa %s10, 0
    %12 = vsyncpa [#allocation5], 0
    %13 = vsyncpa [#allocation4], 0
    %s14 = scalar_lea.sflag [#allocation4], 1
    %15 = vsyncpa %s14, 0
    loop: start=0, step=1, limit=4
    $region2: #{tpu_custom_call.1} parent=1 // loop_pre_header
      _
    $region3: #{tpu_custom_call.1} parent=1 // loop_header
      %s17 = sphi 0, %s21
      %p18 = scmp.ge.s32.totalorder %s17, 4
      %s27 = sphi 0, %s29
      %s30 = sphi 0, %s27
      %s31 = sphi 0, %s30
      %s47 = sphi 0, %s31
      %s51 = sphi 0, %s51
      %s53 = sphi 0, %s51
      %s54 = sphi 0, %s53
      %s68 = sphi 0, %s54
      %s72 = sphi 0, %s72
      %s74 = sphi 0, %s72
      %s75 = sphi 0, %s74
      %s89 = sphi 0, %s75
      %s93 = sphi 0, %s93
      %s95 = sphi 0, %s93
      %s96 = sphi 0, %s95
      %s110 = sphi 0, %s96
      %s116 = sphi 0, %s118
      %s119 = sphi 0, %s116
      %s120 = sphi 0, %s119
      %s136 = sphi 0, %s120
    $region4: #{tpu_custom_call.1} parent=1 // loop_header_branch
      %20 = sbr.rel (%p18) target = $region8
    $region5: #{tpu_custom_call.1} parent=1 // loop_body
      %s22 = ssub.s32 %s17, 1
      %s23 = ssub.s32 %s17, 2
      %s24 = sadd.s32 %s17, 1
      %s25 = ssub.s32 %s17, %s24
      %p26 = scmp.eq.s32.totalorder %s25, 0
      %s28 = sadd.s32 %s27, 1
      %s29 = scalar_select %p26, %s27, %s28
      %p32 = pneg %p26
      %p33 = scmp.eq.s32.totalorder %s17, 1
      %p34 = por %p32, %p33
      %p35 = scmp.ne.s32.totalorder %s27, %s30
      %p36 = scmp.eq.s32.totalorder %s17, 0
      %p37 = por %p35, %p36
      %p38 = scmp.ne.s32.totalorder %s27, %s30
      %p39 = scmp.eq.s32.totalorder %s22, 1
      %p40 = por %p38, %p39
      %p41 = scmp.ne.s32.totalorder %s30, %s31
      %p42 = scmp.eq.s32.totalorder %s22, 0
      %p43 = por %p41, %p42
      %p44 = scmp.ne.s32.totalorder %s30, %s31
      %p45 = scmp.eq.s32.totalorder %s23, 1
      %p46 = por %p44, %p45
      %p48 = scmp.ne.s32.totalorder %s31, %s47
      %p49 = scmp.eq.s32.totalorder %s23, 0
      %p50 = por %p48, %p49
      %s52 = sadd.s32 %s51, 1
      %p55 = scmp.eq.s32.totalorder %s17, 1
      %p56 = scmp.ne.s32.totalorder %s51, %s53
      %p57 = scmp.eq.s32.totalorder %s17, 0
      %p58 = por %p56, %p57
      %p59 = scmp.ne.s32.totalorder %s51, %s53
      %p60 = scmp.eq.s32.totalorder %s22, 1
      %p61 = por %p59, %p60
      %p62 = scmp.ne.s32.totalorder %s53, %s54
      %p63 = scmp.eq.s32.totalorder %s22, 0
      %p64 = por %p62, %p63
      %p65 = scmp.ne.s32.totalorder %s53, %s54
      %p66 = scmp.eq.s32.totalorder %s23, 1
      %p67 = por %p65, %p66
      %p69 = scmp.ne.s32.totalorder %s54, %s68
      %p70 = scmp.eq.s32.totalorder %s23, 0
      %p71 = por %p69, %p70
      %s73 = sadd.s32 %s72, 1
      %p76 = scmp.eq.s32.totalorder %s17, 1
      %p77 = scmp.ne.s32.totalorder %s72, %s74
      %p78 = scmp.eq.s32.totalorder %s17, 0
      %p79 = por %p77, %p78
      %p80 = scmp.ne.s32.totalorder %s72, %s74
      %p81 = scmp.eq.s32.totalorder %s22, 1
      %p82 = por %p80, %p81
      %p83 = scmp.ne.s32.totalorder %s74, %s75
      %p84 = scmp.eq.s32.totalorder %s22, 0
      %p85 = por %p83, %p84
      %p86 = scmp.ne.s32.totalorder %s74, %s75
      %p87 = scmp.eq.s32.totalorder %s23, 1
      %p88 = por %p86, %p87
      %p90 = scmp.ne.s32.totalorder %s75, %s89
      %p91 = scmp.eq.s32.totalorder %s23, 0
      %p92 = por %p90, %p91
      %s94 = sadd.s32 %s93, 1
      %p97 = scmp.eq.s32.totalorder %s17, 1
      %p98 = scmp.ne.s32.totalorder %s93, %s95
      %p99 = scmp.eq.s32.totalorder %s17, 0
      %p100 = por %p98, %p99
      %p101 = scmp.ne.s32.totalorder %s93, %s95
      %p102 = scmp.eq.s32.totalorder %s22, 1
      %p103 = por %p101, %p102
      %p104 = scmp.ne.s32.totalorder %s95, %s96
      %p105 = scmp.eq.s32.totalorder %s22, 0
      %p106 = por %p104, %p105
      %p107 = scmp.ne.s32.totalorder %s95, %s96
      %p108 = scmp.eq.s32.totalorder %s23, 1
      %p109 = por %p107, %p108
      %p111 = scmp.ne.s32.totalorder %s96, %s110
      %p112 = scmp.eq.s32.totalorder %s23, 0
      %p113 = por %p111, %p112
      %s114 = ssub.s32 %s17, %s24
      %p115 = scmp.eq.s32.totalorder %s114, 0
      %s117 = sadd.s32 %s116, 1
      %s118 = scalar_select %p115, %s116, %s117
      %p121 = pneg %p115
      %p122 = scmp.eq.s32.totalorder %s17, 1
      %p123 = por %p121, %p122
      %p124 = scmp.ne.s32.totalorder %s116, %s119
      %p125 = scmp.eq.s32.totalorder %s17, 0
      %p126 = por %p124, %p125
      %p127 = scmp.ne.s32.totalorder %s116, %s119
      %p128 = scmp.eq.s32.totalorder %s22, 1
      %p129 = por %p127, %p128
      %p130 = scmp.ne.s32.totalorder %s119, %s120
      %p131 = scmp.eq.s32.totalorder %s22, 0
      %p132 = por %p130, %p131
      %p133 = scmp.ne.s32.totalorder %s119, %s120
      %p134 = scmp.eq.s32.totalorder %s23, 1
      %p135 = por %p133, %p134
      %p137 = scmp.ne.s32.totalorder %s120, %s136
      %p138 = scmp.eq.s32.totalorder %s23, 0
      %p139 = por %p137, %p138
      %p140 = scmp.le.s32.totalorder 1, %s17
      %p141 = scmp.lt.s32.totalorder %s17, 3
      %p142 = pnand %p140, %p141
      %p143 = pneg %p142
      // Predicated region
      $region9: #{tpu_custom_call.1} parent=5 // pred_check
        _
      $region10: #{tpu_custom_call.1} parent=5 // pred_check_branch
        %145 = sbr.rel (%p142) target = $region12
      $region11: #{tpu_custom_call.1} parent=5 // pred_region
        %s146 = ssub.s32 %s17, 1
        // Predicated region
        $region13: #{tpu_custom_call.1} parent=11 // pred_check
          %p147 = pneg %p64
        $region14: #{tpu_custom_call.1} parent=11 // pred_check_branch
          %149 = sbr.rel (%p147) target = $region16
        $region15: #{tpu_custom_call.1} parent=11 // pred_region
          _
        $region16: #{tpu_custom_call.1} parent=11 // pred_fallthru
          _
        // Predicated region
        $region17: #{tpu_custom_call.1} parent=11 // pred_check
          %p150 = pneg %p85
        $region18: #{tpu_custom_call.1} parent=11 // pred_check_branch
          %152 = sbr.rel (%p150) target = $region20
        $region19: #{tpu_custom_call.1} parent=11 // pred_region
          _
        $region20: #{tpu_custom_call.1} parent=11 // pred_fallthru
          _
        // Predicated region
        $region21: #{tpu_custom_call.1} parent=11 // pred_check
          %p153 = pneg %p106
        $region22: #{tpu_custom_call.1} parent=11 // pred_check_branch
          %155 = sbr.rel (%p153) target = $region24
        $region23: #{tpu_custom_call.1} parent=11 // pred_region
          %s157 = ssub.s32 16, 16
          %158 = vsyncadd [#allocation5], %s157
          %s160 = sshll.u32 %s3, 4
          %s161 = int_to_ptr.vmem [resolvable:$true] %s160
          %163 = dma.vmem_to_smem %s161, 16, [#allocation6], [#allocation5]
        $region24: #{tpu_custom_call.1} parent=11 // pred_fallthru
          _
      $region12: #{tpu_custom_call.1} parent=5 // pred_fallthru
        _
      %p164 = scmp.lt.s32.totalorder %s17, 2
      // Predicated region
      $region25: #{tpu_custom_call.1} parent=5 // pred_check
        %p165 = pneg %p164
      $region26: #{tpu_custom_call.1} parent=5 // pred_check_branch
        %167 = sbr.rel (%p165) target = $region28
      $region27: #{tpu_custom_call.1} parent=5 // pred_region
        // Predicated region
        $region29: #{tpu_custom_call.1} parent=27 // pred_check
          %p168 = pneg %p37
        $region30: #{tpu_custom_call.1} parent=27 // pred_check_branch
          %170 = sbr.rel (%p168) target = $region32
        $region31: #{tpu_custom_call.1} parent=27 // pred_region
          %s171 = sand.u32 %s27, 1
          %s172 = scalar_lea.sflag [#allocation3], %s171
          %s173 = sand.u32 %s27, 1
          %s174 = smul.addr %s173, 8
          %s175 = scalar_lea.vmem [#allocation2], %s174
          %s177 = ssub.s32 128, 128
          %178 = vsyncadd %s172, %s177
          %s179 = smul.addr %s17, 2
          %s180 = smul.addr %s179, 64
          %s181 = scalar_lea.hbm %s0, %s180
          %s183 = sshll.u32 %s175, 4
          %s184 = int_to_ptr.vmem [resolvable:$true] %s183
          %186 = dma.hbm_to_vmem [thread:$0]  %s181, 128, %s184, %s172
        $region32: #{tpu_custom_call.1} parent=27 // pred_fallthru
          _
      $region28: #{tpu_custom_call.1} parent=5 // pred_fallthru
        _
      %p187 = scmp.le.s32.totalorder 1, %s17
      %p188 = scmp.lt.s32.totalorder %s17, 3
      %p189 = pnand %p187, %p188
      %p190 = pneg %p189
      // Predicated region
      $region33: #{tpu_custom_call.1} parent=5 // pred_check
        _
      $region34: #{tpu_custom_call.1} parent=5 // pred_check_branch
        %192 = sbr.rel (%p189) target = $region36
      $region35: #{tpu_custom_call.1} parent=5 // pred_region
        %s193 = ssub.s32 %s17, 1
        %s194 = sand.u32 %s30, 1
        %s195 = scalar_lea.sflag [#allocation3], %s194
        %s196 = sand.u32 %s30, 1
        %s197 = smul.addr %s196, 8
        %s198 = scalar_lea.vmem [#allocation2], %s197
        // Predicated region
        $region37: #{tpu_custom_call.1} parent=35 // pred_check
          %p199 = pneg %p43
        $region38: #{tpu_custom_call.1} parent=35 // pred_check_branch
          %201 = sbr.rel (%p199) target = $region40
        $region39: #{tpu_custom_call.1} parent=35 // pred_region
          %202 = dma.done %s195, 128
        $region40: #{tpu_custom_call.1} parent=35 // pred_fallthru
          _
        // Predicated region
        $region41: #{tpu_custom_call.1} parent=35 // pred_check
          %p203 = pneg %p106
        $region42: #{tpu_custom_call.1} parent=35 // pred_check_branch
          %205 = sbr.rel (%p203) target = $region44
        $region43: #{tpu_custom_call.1} parent=35 // pred_region
          %206 = dma.done [#allocation5], 16
        $region44: #{tpu_custom_call.1} parent=35 // pred_fallthru
          _
        %207 = sfence
        %s208 = sand.u32 %s30, 1
        %s209 = scalar_lea.sflag [#allocation3], %s208
        %s210 = sand.u32 %s30, 1
        %s211 = smul.addr %s210, 8
        %s212 = scalar_lea.vmem [#allocation2], %s211
        %p213 = pneg %p43
        %p214 = pneg %p40
        %p215 = pneg %p64
        %p216 = pneg %p61
        %p217 = pneg %p85
        %p218 = pneg %p82
        %p219 = pneg %p106
        %p220 = pneg %p103
        %p221 = pneg %p132
        %p222 = pneg %p129
        %s223 = sand.u32 %s119, 1
        %s224 = scalar_lea.sflag [#allocation4], %s223
        %s225 = sand.u32 %s119, 1
        %s226 = smul.addr %s225, 8
        %s227 = scalar_lea.vmem [#allocation7], %s226
        %v228 = vld [vmem:[%s198] sm:$0xff]
        %v230 = vcombine.high %v228, %v228
        %vm232 = vcmask 1043456
        %v233 = vsel %vm232, %v228, 0.0
        %v234 = vsel %vm232, %v230, 0.0
        %v235 = vadd.f32 %v233, %v234
        %236 = vadd.xlane.f32.xlu0 %v235
        %v237 = vpop.xlane.xlu0 %236
        %v238 = vrcp.pop 256.0
        %v239 = vmul.f32 %v237, %v238
        %v240 = vld [vmem:[%s1] sm:$0xf]
        %v241 = vld [vmem:[%s2] sm:$0xf]
        %v242 = vmul.f32 %v240, %v239
        %vm243 = vcmask 11264
        %v244 = vsel %vm243, %v242, 0.0
        %v245 = vrot.slane %v244, 4
        %v246 = vadd.f32 %v244, %v245
        %v247 = vrot.slane %v246, 2
        %v248 = vadd.f32 %v246, %v247
        %v249 = vrot.slane %v248, 1
        %v250 = vadd.f32 %v248, %v249
        %v251 = vmax.f32 %v250, 0.0
        %v252 = vmul.f32 %v241, %v251
        %v253 = vsel %vm243, %v252, 0.0
        %254 = vadd.xlane.f32.xlu0 %v253
        %v255 = vpop.xlane.xlu0 %254
        %v256 = vxor.u32 %v255, 2147483648
        %v257 = vmul.f32 %v256, 1.442695
        %v258 = vpow.pop %v257
        %v259 = vadd.f32 %v258, 1.0
        %v260 = vrcp.pop %v259
        %v261 = vmul.f32 1.0, %v260
        %v264 = vunpack.c.l.s4 839922192
        %v265 = vunpack.c.0.s8 %v264
        %v266 = vlaneseq
        %v267 = vshrl.u32 %v266, 7
        %v268 = vsub.s32 %v265, %v267
        %v269 = vrot.slane %v261, %v268
        %v271 = vmul.f32 %v228, %v269
        %v273 = vcombine.high %v271, %v271
        %v275 = vsel %vm232, %v271, 0.0
        %v276 = vrot.slane %v275, 4
        %v277 = vadd.f32 %v275, %v276
        %v278 = vrot.slane %v277, 2
        %v279 = vadd.f32 %v277, %v278
        %v280 = vrot.slane %v279, 1
        %v281 = vadd.f32 %v279, %v280
        %v282 = vsel %vm232, %v273, 0.0
        %v283 = vrot.slane %v282, 4
        %v284 = vadd.f32 %v282, %v283
        %v285 = vrot.slane %v284, 2
        %v286 = vadd.f32 %v284, %v285
        %v287 = vrot.slane %v286, 1
        %v288 = vadd.f32 %v286, %v287
        %v289 = vrcp.pop 4.0
        %v290 = vmul.f32 %v281, %v289
        %v291 = vmul.f32 %v288, %v289
        %s292 = sld [smem:[#allocation6]]
        %s293 = sld [smem:[#allocation6 + $0x1]]
        %s294 = sld [smem:[#allocation6 + $0x2]]
        %s295 = sld [smem:[#allocation6 + $0x3]]
        %s296 = sld [smem:[#allocation6 + $0x4]]
        %s297 = sld [smem:[#allocation6 + $0x5]]
        %s298 = sld [smem:[#allocation6 + $0x6]]
        %s299 = sld [smem:[#allocation6 + $0x7]]
        %s300 = sld [smem:[#allocation6 + $0x8]]
        %s301 = sld [smem:[#allocation6 + $0x9]]
        %s302 = sld [smem:[#allocation6 + $0xa]]
        %s303 = sld [smem:[#allocation6 + $0xb]]
        %s304 = sld [smem:[#allocation6 + $0xc]]
        %s305 = sld [smem:[#allocation6 + $0xd]]
        %s306 = sld [smem:[#allocation6 + $0xe]]
        %s307 = sld [smem:[#allocation6 + $0xf]]
        %s308 = sld [smem:[#allocation6 + $0x10]]
        %s309 = sld [smem:[#allocation6 + $0x11]]
        %s310 = sld [smem:[#allocation6 + $0x12]]
        %s311 = sld [smem:[#allocation6 + $0x13]]
        %s312 = sld [smem:[#allocation6 + $0x14]]
        %s313 = sld [smem:[#allocation6 + $0x15]]
        %s314 = sld [smem:[#allocation6 + $0x16]]
        %s315 = sld [smem:[#allocation6 + $0x17]]
        %s316 = sld [smem:[#allocation6 + $0x18]]
        %s317 = sld [smem:[#allocation6 + $0x19]]
        %s318 = sld [smem:[#allocation6 + $0x1a]]
        %s319 = sld [smem:[#allocation6 + $0x1b]]
        %s320 = sld [smem:[#allocation6 + $0x1c]]
        %s321 = sld [smem:[#allocation6 + $0x1d]]
        %s322 = sld [smem:[#allocation6 + $0x1e]]
        %s323 = sld [smem:[#allocation6 + $0x1f]]
        %s324 = sld [smem:[#allocation6 + $0x20]]
        %s325 = sld [smem:[#allocation6 + $0x21]]
        %s326 = sld [smem:[#allocation6 + $0x22]]
        %s327 = sld [smem:[#allocation6 + $0x23]]
        %s328 = sld [smem:[#allocation6 + $0x24]]
        %s329 = sld [smem:[#allocation6 + $0x25]]
        %s330 = sld [smem:[#allocation6 + $0x26]]
        %s331 = sld [smem:[#allocation6 + $0x27]]
        %s332 = sld [smem:[#allocation6 + $0x28]]
        %s333 = sld [smem:[#allocation6 + $0x29]]
        %s334 = sld [smem:[#allocation6 + $0x2a]]
        %s335 = sld [smem:[#allocation6 + $0x2b]]
        %s336 = sld [smem:[#allocation6 + $0x2c]]
        %s337 = sld [smem:[#allocation6 + $0x2d]]
        %s338 = sld [smem:[#allocation6 + $0x2e]]
        %s339 = sld [smem:[#allocation6 + $0x2f]]
        %s340 = sld [smem:[#allocation6 + $0x30]]
        %342 = vrot.lane.b32.xlu0 %v290, 112
        %v343 = vpop.permute.xlu0 %342
        %345 = vrot.lane.b32.xlu0 %v290, 96
        %v346 = vpop.permute.xlu0 %345
        %348 = vrot.lane.b32.xlu0 %v290, 80
        %v349 = vpop.permute.xlu0 %348
        %351 = vrot.lane.b32.xlu0 %v290, 64
        %v352 = vpop.permute.xlu0 %351
        %354 = vrot.lane.b32.xlu0 %v290, 48
        %v355 = vpop.permute.xlu0 %354
        %357 = vrot.lane.b32.xlu0 %v290, 32
        %v358 = vpop.permute.xlu0 %357
        %360 = vrot.lane.b32.xlu0 %v290, 16
        %v361 = vpop.permute.xlu0 %360
        %364 = vrot.lane.b32.xlu0 %v291, 112
        %v365 = vpop.permute.xlu0 %364
        %367 = vrot.lane.b32.xlu0 %v291, 96
        %v368 = vpop.permute.xlu0 %367
        %370 = vrot.lane.b32.xlu0 %v291, 80
        %v371 = vpop.permute.xlu0 %370
        %373 = vrot.lane.b32.xlu0 %v291, 64
        %v374 = vpop.permute.xlu0 %373
        %376 = vrot.lane.b32.xlu0 %v291, 48
        %v377 = vpop.permute.xlu0 %376
        %379 = vrot.lane.b32.xlu0 %v291, 32
        %v380 = vpop.permute.xlu0 %379
        %382 = vrot.lane.b32.xlu0 %v291, 16
        %v383 = vpop.permute.xlu0 %382
        %vm385 = vcmask 1040384
        %v386 = vsel %vm385, %v290, %v343
        %vm387 = vcmask 1041408
        %v388 = vsel %vm387, %v386, %v346
        %vm389 = vcmask 1042432
        %v390 = vsel %vm389, %v388, %v349
        %v391 = vsel %vm232, %v390, %v352
        %vm392 = vcmask 1044480
        %v393 = vsel %vm392, %v391, %v355
        %vm394 = vcmask 1045504
        %v395 = vsel %vm394, %v393, %v358
        %vm396 = vcmask 1046528
        %v397 = vsel %vm396, %v395, %v361
        %v398 = vsel %vm385, %v291, %v365
        %v399 = vsel %vm387, %v398, %v368
        %v400 = vsel %vm389, %v399, %v371
        %v401 = vsel %vm232, %v400, %v374
        %v402 = vsel %vm392, %v401, %v377
        %v403 = vsel %vm394, %v402, %v380
        %v404 = vsel %vm396, %v403, %v383
        %v407 = vrot.slane %v397, 5
        %v408 = vrot.slane %v404, 5
        %v409 = vsel %vm389, %v407, %v408
        %v412 = vsel %vm389, 0.0, %v407
        %v413 = vsel %vm389, %v408, 0.0
        %416 = vrot.lane.b32.xlu0 %v412, 3
        %v417 = vpop.permute.xlu0 %416
        %418 = vrot.lane.b32.xlu0 %v409, 3
        %v419 = vpop.permute.xlu0 %418
        %420 = vrot.lane.b32.xlu0 %v413, 3
        %v421 = vpop.permute.xlu0 %420
        %vm425 = vcmask 23552
        %v426 = vsel %vm425, 0.0, %v417
        %v427 = vsel %vm425, 0.0, %v419
        %v428 = vsel %vm425, 0.0, %v421
        %vm429 = vcmask 154624
        %v430 = vsel %vm429, %v426, 0.0
        %v431 = vsel %vm429, %v427, 0.0
        %v432 = vsel %vm429, %v428, 0.0
        %v433 = vstv %s292
        %v434 = vmul.f32 %v433, %v430
        %v435 = vmul.f32 %v433, %v431
        %v436 = vadd.f32 %v434, 0.0
        %v437 = vadd.f32 %v435, 0.0
        %v438 = vstv %s293
        %v439 = vmul.f32 %v438, %v430
        %v440 = vmul.f32 %v438, %v431
        %v441 = vadd.f32 %v439, 0.0
        %v442 = vadd.f32 %v440, 0.0
        %v443 = vstv %s294
        %v444 = vmul.f32 %v443, %v430
        %v445 = vmul.f32 %v443, %v431
        %v446 = vadd.f32 %v444, 0.0
        %v447 = vadd.f32 %v445, 0.0
        %v448 = vstv %s295
        %v449 = vmul.f32 %v448, %v430
        %v450 = vmul.f32 %v448, %v431
        %v451 = vadd.f32 %v449, 0.0
        %v452 = vadd.f32 %v450, 0.0
        %v453 = vstv %s296
        %v454 = vmul.f32 %v453, %v430
        %v455 = vmul.f32 %v453, %v431
        %458 = vrot.lane.b32.xlu0 %v454, 124
        %v459 = vpop.permute.xlu0 %458
        %460 = vrot.lane.b32.xlu0 %v455, 124
        %v461 = vpop.permute.xlu0 %460
        %v464 = vadd.f32 %v436, %v459
        %v465 = vadd.f32 %v437, %v461
        %v466 = vstv %s297
        %v467 = vmul.f32 %v466, %v430
        %v468 = vmul.f32 %v466, %v431
        %471 = vrot.lane.b32.xlu0 %v467, 124
        %v472 = vpop.permute.xlu0 %471
        %473 = vrot.lane.b32.xlu0 %v468, 124
        %v474 = vpop.permute.xlu0 %473
        %v477 = vadd.f32 %v441, %v472
        %v478 = vadd.f32 %v442, %v474
        %v479 = vstv %s298
        %v480 = vmul.f32 %v479, %v430
        %v481 = vmul.f32 %v479, %v431
        %484 = vrot.lane.b32.xlu0 %v480, 124
        %v485 = vpop.permute.xlu0 %484
        %486 = vrot.lane.b32.xlu0 %v481, 124
        %v487 = vpop.permute.xlu0 %486
        %v490 = vadd.f32 %v446, %v485
        %v491 = vadd.f32 %v447, %v487
        %v492 = vstv %s299
        %v493 = vmul.f32 %v492, %v430
        %v494 = vmul.f32 %v492, %v431
        %v495 = vmul.f32 %v492, %v432
        %v499 = vrot.slane %v493, 1
        %v500 = vrot.slane %v494, 1
        %v501 = vsel %vm396, %v499, %v500
        %v502 = vrot.slane %v495, 1
        %v503 = vsel %vm396, %v500, %v502
        %504 = vrot.lane.b32.xlu0 %v501, 3
        %v505 = vpop.permute.xlu0 %504
        %506 = vrot.lane.b32.xlu0 %v503, 3
        %v507 = vpop.permute.xlu0 %506
        %v510 = vadd.f32 %v451, %v505
        %v511 = vadd.f32 %v452, %v507
        %v512 = vstv %s300
        %v513 = vmul.f32 %v512, %v430
        %v514 = vmul.f32 %v512, %v431
        %v515 = vmul.f32 %v512, %v432
        %v519 = vrot.slane %v513, 1
        %v520 = vrot.slane %v514, 1
        %v521 = vsel %vm396, %v519, %v520
        %v522 = vrot.slane %v515, 1
        %v523 = vsel %vm396, %v520, %v522
        %524 = vrot.lane.b32.xlu0 %v521, 127
        %v525 = vpop.permute.xlu0 %524
        %526 = vrot.lane.b32.xlu0 %v523, 127
        %v527 = vpop.permute.xlu0 %526
        %v530 = vadd.f32 %v464, %v525
        %v531 = vadd.f32 %v465, %v527
        %v532 = vstv %s301
        %v533 = vmul.f32 %v532, %v430
        %v534 = vmul.f32 %v532, %v431
        %v535 = vmul.f32 %v532, %v432
        %v539 = vrot.slane %v533, 1
        %v540 = vrot.slane %v534, 1
        %v541 = vsel %vm396, %v539, %v540
        %v542 = vrot.slane %v535, 1
        %v543 = vsel %vm396, %v540, %v542
        %544 = vrot.lane.b32.xlu0 %v541, 127
        %v545 = vpop.permute.xlu0 %544
        %546 = vrot.lane.b32.xlu0 %v543, 127
        %v547 = vpop.permute.xlu0 %546
        %v550 = vadd.f32 %v477, %v545
        %v551 = vadd.f32 %v478, %v547
        %v552 = vstv %s302
        %v553 = vmul.f32 %v552, %v430
        %v554 = vmul.f32 %v552, %v431
        %v555 = vmul.f32 %v552, %v432
        %v559 = vrot.slane %v553, 1
        %v560 = vrot.slane %v554, 1
        %v561 = vsel %vm396, %v559, %v560
        %v562 = vrot.slane %v555, 1
        %v563 = vsel %vm396, %v560, %v562
        %564 = vrot.lane.b32.xlu0 %v561, 127
        %v565 = vpop.permute.xlu0 %564
        %566 = vrot.lane.b32.xlu0 %v563, 127
        %v567 = vpop.permute.xlu0 %566
        %v570 = vadd.f32 %v490, %v565
        %v571 = vadd.f32 %v491, %v567
        %v572 = vstv %s303
        %v573 = vmul.f32 %v572, %v430
        %v574 = vmul.f32 %v572, %v431
        %v575 = vmul.f32 %v572, %v432
        %v579 = vrot.slane %v573, 1
        %v580 = vrot.slane %v574, 1
        %v581 = vsel %vm396, %v579, %v580
        %v582 = vrot.slane %v575, 1
        %v583 = vsel %vm396, %v580, %v582
        %584 = vrot.lane.b32.xlu0 %v581, 127
        %v585 = vpop.permute.xlu0 %584
        %586 = vrot.lane.b32.xlu0 %v583, 127
        %v587 = vpop.permute.xlu0 %586
        %v590 = vadd.f32 %v510, %v585
        %v591 = vadd.f32 %v511, %v587
        %v592 = vstv %s304
        %v593 = vmul.f32 %v592, %v430
        %v594 = vmul.f32 %v592, %v431
        %v595 = vmul.f32 %v592, %v432
        %v599 = vrot.slane %v593, 1
        %v600 = vrot.slane %v594, 1
        %v601 = vsel %vm396, %v599, %v600
        %v602 = vrot.slane %v595, 1
        %v603 = vsel %vm396, %v600, %v602
        %604 = vrot.lane.b32.xlu0 %v601, 123
        %v605 = vpop.permute.xlu0 %604
        %606 = vrot.lane.b32.xlu0 %v603, 123
        %v607 = vpop.permute.xlu0 %606
        %v610 = vadd.f32 %v530, %v605
        %v611 = vadd.f32 %v531, %v607
        %v612 = vstv %s305
        %v613 = vmul.f32 %v612, %v430
        %v614 = vmul.f32 %v612, %v431
        %v615 = vmul.f32 %v612, %v432
        %v619 = vrot.slane %v613, 1
        %v620 = vrot.slane %v614, 1
        %v621 = vsel %vm396, %v619, %v620
        %v622 = vrot.slane %v615, 1
        %v623 = vsel %vm396, %v620, %v622
        %624 = vrot.lane.b32.xlu0 %v621, 123
        %v625 = vpop.permute.xlu0 %624
        %626 = vrot.lane.b32.xlu0 %v623, 123
        %v627 = vpop.permute.xlu0 %626
        %v630 = vadd.f32 %v550, %v625
        %v631 = vadd.f32 %v551, %v627
        %v632 = vstv %s306
        %v633 = vmul.f32 %v632, %v430
        %v634 = vmul.f32 %v632, %v431
        %v635 = vmul.f32 %v632, %v432
        %v639 = vrot.slane %v633, 2
        %v640 = vrot.slane %v634, 2
        %v641 = vsel %vm394, %v639, %v640
        %v642 = vrot.slane %v635, 2
        %v643 = vsel %vm394, %v640, %v642
        %644 = vrot.lane.b32.xlu0 %v641, 2
        %v645 = vpop.permute.xlu0 %644
        %646 = vrot.lane.b32.xlu0 %v643, 2
        %v647 = vpop.permute.xlu0 %646
        %v650 = vadd.f32 %v570, %v645
        %v651 = vadd.f32 %v571, %v647
        %v652 = vstv %s307
        %v653 = vmul.f32 %v652, %v430
        %v654 = vmul.f32 %v652, %v431
        %v655 = vmul.f32 %v652, %v432
        %v659 = vrot.slane %v653, 2
        %v660 = vrot.slane %v654, 2
        %v661 = vsel %vm394, %v659, %v660
        %v662 = vrot.slane %v655, 2
        %v663 = vsel %vm394, %v660, %v662
        %664 = vrot.lane.b32.xlu0 %v661, 2
        %v665 = vpop.permute.xlu0 %664
        %666 = vrot.lane.b32.xlu0 %v663, 2
        %v667 = vpop.permute.xlu0 %666
        %v670 = vadd.f32 %v590, %v665
        %v671 = vadd.f32 %v591, %v667
        %v672 = vstv %s308
        %v673 = vmul.f32 %v672, %v430
        %v674 = vmul.f32 %v672, %v431
        %v675 = vmul.f32 %v672, %v432
        %v679 = vrot.slane %v673, 2
        %v680 = vrot.slane %v674, 2
        %v681 = vsel %vm394, %v679, %v680
        %v682 = vrot.slane %v675, 2
        %v683 = vsel %vm394, %v680, %v682
        %684 = vrot.lane.b32.xlu0 %v681, 126
        %v685 = vpop.permute.xlu0 %684
        %686 = vrot.lane.b32.xlu0 %v683, 126
        %v687 = vpop.permute.xlu0 %686
        %v690 = vadd.f32 %v610, %v685
        %v691 = vadd.f32 %v611, %v687
        %v692 = vstv %s309
        %v693 = vmul.f32 %v692, %v430
        %v694 = vmul.f32 %v692, %v431
        %v695 = vmul.f32 %v692, %v432
        %v699 = vrot.slane %v693, 2
        %v700 = vrot.slane %v694, 2
        %v701 = vsel %vm394, %v699, %v700
        %v702 = vrot.slane %v695, 2
        %v703 = vsel %vm394, %v700, %v702
        %704 = vrot.lane.b32.xlu0 %v701, 126
        %v705 = vpop.permute.xlu0 %704
        %706 = vrot.lane.b32.xlu0 %v703, 126
        %v707 = vpop.permute.xlu0 %706
        %v710 = vadd.f32 %v630, %v705
        %v711 = vadd.f32 %v631, %v707
        %v712 = vstv %s310
        %v713 = vmul.f32 %v712, %v430
        %v714 = vmul.f32 %v712, %v431
        %v715 = vmul.f32 %v712, %v432
        %v719 = vrot.slane %v713, 2
        %v720 = vrot.slane %v714, 2
        %v721 = vsel %vm394, %v719, %v720
        %v722 = vrot.slane %v715, 2
        %v723 = vsel %vm394, %v720, %v722
        %724 = vrot.lane.b32.xlu0 %v721, 126
        %v725 = vpop.permute.xlu0 %724
        %726 = vrot.lane.b32.xlu0 %v723, 126
        %v727 = vpop.permute.xlu0 %726
        %v730 = vadd.f32 %v650, %v725
        %v731 = vadd.f32 %v651, %v727
        %v732 = vstv %s311
        %v733 = vmul.f32 %v732, %v430
        %v734 = vmul.f32 %v732, %v431
        %v735 = vmul.f32 %v732, %v432
        %v739 = vrot.slane %v733, 2
        %v740 = vrot.slane %v734, 2
        %v741 = vsel %vm394, %v739, %v740
        %v742 = vrot.slane %v735, 2
        %v743 = vsel %vm394, %v740, %v742
        %744 = vrot.lane.b32.xlu0 %v741, 126
        %v745 = vpop.permute.xlu0 %744
        %746 = vrot.lane.b32.xlu0 %v743, 126
        %v747 = vpop.permute.xlu0 %746
        %v750 = vadd.f32 %v670, %v745
        %v751 = vadd.f32 %v671, %v747
        %v752 = vstv %s312
        %v753 = vmul.f32 %v752, %v430
        %v754 = vmul.f32 %v752, %v431
        %v755 = vmul.f32 %v752, %v432
        %v759 = vrot.slane %v753, 2
        %v760 = vrot.slane %v754, 2
        %v761 = vsel %vm394, %v759, %v760
        %v762 = vrot.slane %v755, 2
        %v763 = vsel %vm394, %v760, %v762
        %764 = vrot.lane.b32.xlu0 %v761, 122
        %v765 = vpop.permute.xlu0 %764
        %766 = vrot.lane.b32.xlu0 %v763, 122
        %v767 = vpop.permute.xlu0 %766
        %v770 = vadd.f32 %v690, %v765
        %v771 = vadd.f32 %v691, %v767
        %v772 = vstv %s313
        %v773 = vmul.f32 %v772, %v430
        %v774 = vmul.f32 %v772, %v431
        %v775 = vmul.f32 %v772, %v432
        %v779 = vrot.slane %v773, 3
        %v780 = vrot.slane %v774, 3
        %v781 = vsel %vm392, %v779, %v780
        %v782 = vrot.slane %v775, 3
        %v783 = vsel %vm392, %v780, %v782
        %784 = vrot.lane.b32.xlu0 %v781, 1
        %v785 = vpop.permute.xlu0 %784
        %786 = vrot.lane.b32.xlu0 %v783, 1
        %v787 = vpop.permute.xlu0 %786
        %v790 = vadd.f32 %v710, %v785
        %v791 = vadd.f32 %v711, %v787
        %v792 = vstv %s314
        %v793 = vmul.f32 %v792, %v430
        %v794 = vmul.f32 %v792, %v431
        %v795 = vmul.f32 %v792, %v432
        %v799 = vrot.slane %v793, 3
        %v800 = vrot.slane %v794, 3
        %v801 = vsel %vm392, %v799, %v800
        %v802 = vrot.slane %v795, 3
        %v803 = vsel %vm392, %v800, %v802
        %804 = vrot.lane.b32.xlu0 %v801, 1
        %v805 = vpop.permute.xlu0 %804
        %806 = vrot.lane.b32.xlu0 %v803, 1
        %v807 = vpop.permute.xlu0 %806
        %v810 = vadd.f32 %v730, %v805
        %v811 = vadd.f32 %v731, %v807
        %v812 = vstv %s315
        %v813 = vmul.f32 %v812, %v430
        %v814 = vmul.f32 %v812, %v431
        %v815 = vmul.f32 %v812, %v432
        %v819 = vrot.slane %v813, 3
        %v820 = vrot.slane %v814, 3
        %v821 = vsel %vm392, %v819, %v820
        %v822 = vrot.slane %v815, 3
        %v823 = vsel %vm392, %v820, %v822
        %824 = vrot.lane.b32.xlu0 %v821, 1
        %v825 = vpop.permute.xlu0 %824
        %826 = vrot.lane.b32.xlu0 %v823, 1
        %v827 = vpop.permute.xlu0 %826
        %v830 = vadd.f32 %v750, %v825
        %v831 = vadd.f32 %v751, %v827
        %v832 = vstv %s316
        %v833 = vmul.f32 %v832, %v430
        %v834 = vmul.f32 %v832, %v431
        %v835 = vmul.f32 %v832, %v432
        %v839 = vrot.slane %v833, 3
        %v840 = vrot.slane %v834, 3
        %v841 = vsel %vm392, %v839, %v840
        %v842 = vrot.slane %v835, 3
        %v843 = vsel %vm392, %v840, %v842
        %844 = vrot.lane.b32.xlu0 %v841, 125
        %v845 = vpop.permute.xlu0 %844
        %846 = vrot.lane.b32.xlu0 %v843, 125
        %v847 = vpop.permute.xlu0 %846
        %v850 = vadd.f32 %v770, %v845
        %v851 = vadd.f32 %v771, %v847
        %v852 = vstv %s317
        %v853 = vmul.f32 %v852, %v430
        %v854 = vmul.f32 %v852, %v431
        %v855 = vmul.f32 %v852, %v432
        %v859 = vrot.slane %v853, 3
        %v860 = vrot.slane %v854, 3
        %v861 = vsel %vm392, %v859, %v860
        %v862 = vrot.slane %v855, 3
        %v863 = vsel %vm392, %v860, %v862
        %864 = vrot.lane.b32.xlu0 %v861, 125
        %v865 = vpop.permute.xlu0 %864
        %866 = vrot.lane.b32.xlu0 %v863, 125
        %v867 = vpop.permute.xlu0 %866
        %v870 = vadd.f32 %v790, %v865
        %v871 = vadd.f32 %v791, %v867
        %v872 = vstv %s318
        %v873 = vmul.f32 %v872, %v430
        %v874 = vmul.f32 %v872, %v431
        %v875 = vmul.f32 %v872, %v432
        %v879 = vrot.slane %v873, 3
        %v880 = vrot.slane %v874, 3
        %v881 = vsel %vm392, %v879, %v880
        %v882 = vrot.slane %v875, 3
        %v883 = vsel %vm392, %v880, %v882
        %884 = vrot.lane.b32.xlu0 %v881, 125
        %v885 = vpop.permute.xlu0 %884
        %886 = vrot.lane.b32.xlu0 %v883, 125
        %v887 = vpop.permute.xlu0 %886
        %v890 = vadd.f32 %v810, %v885
        %v891 = vadd.f32 %v811, %v887
        %v892 = vstv %s319
        %v893 = vmul.f32 %v892, %v430
        %v894 = vmul.f32 %v892, %v431
        %v895 = vmul.f32 %v892, %v432
        %v899 = vrot.slane %v893, 3
        %v900 = vrot.slane %v894, 3
        %v901 = vsel %vm392, %v899, %v900
        %v902 = vrot.slane %v895, 3
        %v903 = vsel %vm392, %v900, %v902
        %904 = vrot.lane.b32.xlu0 %v901, 125
        %v905 = vpop.permute.xlu0 %904
        %906 = vrot.lane.b32.xlu0 %v903, 125
        %v907 = vpop.permute.xlu0 %906
        %v910 = vadd.f32 %v830, %v905
        %v911 = vadd.f32 %v831, %v907
        %v912 = vstv %s320
        %v913 = vmul.f32 %v912, %v430
        %v914 = vmul.f32 %v912, %v431
        %v915 = vmul.f32 %v912, %v432
        %v919 = vrot.slane %v913, 4
        %v920 = vrot.slane %v914, 4
        %v921 = vsel %vm232, %v919, %v920
        %v922 = vrot.slane %v915, 4
        %v923 = vsel %vm232, %v920, %v922
        %v926 = vadd.f32 %v850, %v921
        %v927 = vadd.f32 %v851, %v923
        %v928 = vstv %s321
        %v929 = vmul.f32 %v928, %v430
        %v930 = vmul.f32 %v928, %v431
        %v931 = vmul.f32 %v928, %v432
        %v935 = vrot.slane %v929, 4
        %v936 = vrot.slane %v930, 4
        %v937 = vsel %vm232, %v935, %v936
        %v938 = vrot.slane %v931, 4
        %v939 = vsel %vm232, %v936, %v938
        %v942 = vadd.f32 %v870, %v937
        %v943 = vadd.f32 %v871, %v939
        %v944 = vstv %s322
        %v945 = vmul.f32 %v944, %v430
        %v946 = vmul.f32 %v944, %v431
        %v947 = vmul.f32 %v944, %v432
        %v951 = vrot.slane %v945, 4
        %v952 = vrot.slane %v946, 4
        %v953 = vsel %vm232, %v951, %v952
        %v954 = vrot.slane %v947, 4
        %v955 = vsel %vm232, %v952, %v954
        %v958 = vadd.f32 %v890, %v953
        %v959 = vadd.f32 %v891, %v955
        %v960 = vstv %s323
        %v961 = vmul.f32 %v960, %v430
        %v962 = vmul.f32 %v960, %v431
        %v963 = vmul.f32 %v960, %v432
        %v967 = vrot.slane %v961, 4
        %v968 = vrot.slane %v962, 4
        %v969 = vsel %vm232, %v967, %v968
        %v970 = vrot.slane %v963, 4
        %v971 = vsel %vm232, %v968, %v970
        %v974 = vadd.f32 %v910, %v969
        %v975 = vadd.f32 %v911, %v971
        %v976 = vstv %s324
        %v977 = vmul.f32 %v976, %v430
        %v978 = vmul.f32 %v976, %v431
        %v979 = vmul.f32 %v976, %v432
        %v983 = vrot.slane %v977, 4
        %v984 = vrot.slane %v978, 4
        %v985 = vsel %vm232, %v983, %v984
        %v986 = vrot.slane %v979, 4
        %v987 = vsel %vm232, %v984, %v986
        %988 = vrot.lane.b32.xlu0 %v985, 124
        %v989 = vpop.permute.xlu0 %988
        %990 = vrot.lane.b32.xlu0 %v987, 124
        %v991 = vpop.permute.xlu0 %990
        %v994 = vadd.f32 %v926, %v989
        %v995 = vadd.f32 %v927, %v991
        %v996 = vstv %s325
        %v997 = vmul.f32 %v996, %v430
        %v998 = vmul.f32 %v996, %v431
        %v999 = vmul.f32 %v996, %v432
        %v1003 = vrot.slane %v997, 4
        %v1004 = vrot.slane %v998, 4
        %v1005 = vsel %vm232, %v1003, %v1004
        %v1006 = vrot.slane %v999, 4
        %v1007 = vsel %vm232, %v1004, %v1006
        %1008 = vrot.lane.b32.xlu0 %v1005, 124
        %v1009 = vpop.permute.xlu0 %1008
        %1010 = vrot.lane.b32.xlu0 %v1007, 124
        %v1011 = vpop.permute.xlu0 %1010
        %v1014 = vadd.f32 %v942, %v1009
        %v1015 = vadd.f32 %v943, %v1011
        %v1016 = vstv %s326
        %v1017 = vmul.f32 %v1016, %v430
        %v1018 = vmul.f32 %v1016, %v431
        %v1019 = vmul.f32 %v1016, %v432
        %v1023 = vrot.slane %v1017, 4
        %v1024 = vrot.slane %v1018, 4
        %v1025 = vsel %vm232, %v1023, %v1024
        %v1026 = vrot.slane %v1019, 4
        %v1027 = vsel %vm232, %v1024, %v1026
        %1028 = vrot.lane.b32.xlu0 %v1025, 124
        %v1029 = vpop.permute.xlu0 %1028
        %1030 = vrot.lane.b32.xlu0 %v1027, 124
        %v1031 = vpop.permute.xlu0 %1030
        %v1034 = vadd.f32 %v958, %v1029
        %v1035 = vadd.f32 %v959, %v1031
        %v1036 = vstv %s327
        %v1037 = vmul.f32 %v1036, %v430
        %v1038 = vmul.f32 %v1036, %v431
        %v1039 = vmul.f32 %v1036, %v432
        %v1043 = vrot.slane %v1037, 5
        %v1044 = vrot.slane %v1038, 5
        %v1045 = vsel %vm389, %v1043, %v1044
        %v1046 = vrot.slane %v1039, 5
        %v1047 = vsel %vm389, %v1044, %v1046
        %1048 = vrot.lane.b32.xlu0 %v1045, 3
        %v1049 = vpop.permute.xlu0 %1048
        %1050 = vrot.lane.b32.xlu0 %v1047, 3
        %v1051 = vpop.permute.xlu0 %1050
        %v1054 = vadd.f32 %v974, %v1049
        %v1055 = vadd.f32 %v975, %v1051
        %v1056 = vstv %s328
        %v1057 = vmul.f32 %v1056, %v430
        %v1058 = vmul.f32 %v1056, %v431
        %v1059 = vmul.f32 %v1056, %v432
        %v1063 = vrot.slane %v1057, 5
        %v1064 = vrot.slane %v1058, 5
        %v1065 = vsel %vm389, %v1063, %v1064
        %v1066 = vrot.slane %v1059, 5
        %v1067 = vsel %vm389, %v1064, %v1066
        %1068 = vrot.lane.b32.xlu0 %v1065, 127
        %v1069 = vpop.permute.xlu0 %1068
        %1070 = vrot.lane.b32.xlu0 %v1067, 127
        %v1071 = vpop.permute.xlu0 %1070
        %v1074 = vadd.f32 %v994, %v1069
        %v1075 = vadd.f32 %v995, %v1071
        %v1076 = vstv %s329
        %v1077 = vmul.f32 %v1076, %v430
        %v1078 = vmul.f32 %v1076, %v431
        %v1079 = vmul.f32 %v1076, %v432
        %v1083 = vrot.slane %v1077, 5
        %v1084 = vrot.slane %v1078, 5
        %v1085 = vsel %vm389, %v1083, %v1084
        %v1086 = vrot.slane %v1079, 5
        %v1087 = vsel %vm389, %v1084, %v1086
        %1088 = vrot.lane.b32.xlu0 %v1085, 127
        %v1089 = vpop.permute.xlu0 %1088
        %1090 = vrot.lane.b32.xlu0 %v1087, 127
        %v1091 = vpop.permute.xlu0 %1090
        %v1094 = vadd.f32 %v1014, %v1089
        %v1095 = vadd.f32 %v1015, %v1091
        %v1096 = vstv %s330
        %v1097 = vmul.f32 %v1096, %v430
        %v1098 = vmul.f32 %v1096, %v431
        %v1099 = vmul.f32 %v1096, %v432
        %v1103 = vrot.slane %v1097, 5
        %v1104 = vrot.slane %v1098, 5
        %v1105 = vsel %vm389, %v1103, %v1104
        %v1106 = vrot.slane %v1099, 5
        %v1107 = vsel %vm389, %v1104, %v1106
        %1108 = vrot.lane.b32.xlu0 %v1105, 127
        %v1109 = vpop.permute.xlu0 %1108
        %1110 = vrot.lane.b32.xlu0 %v1107, 127
        %v1111 = vpop.permute.xlu0 %1110
        %v1114 = vadd.f32 %v1034, %v1109
        %v1115 = vadd.f32 %v1035, %v1111
        %v1116 = vstv %s331
        %v1117 = vmul.f32 %v1116, %v430
        %v1118 = vmul.f32 %v1116, %v431
        %v1119 = vmul.f32 %v1116, %v432
        %v1123 = vrot.slane %v1117, 5
        %v1124 = vrot.slane %v1118, 5
        %v1125 = vsel %vm389, %v1123, %v1124
        %v1126 = vrot.slane %v1119, 5
        %v1127 = vsel %vm389, %v1124, %v1126
        %1128 = vrot.lane.b32.xlu0 %v1125, 127
        %v1129 = vpop.permute.xlu0 %1128
        %1130 = vrot.lane.b32.xlu0 %v1127, 127
        %v1131 = vpop.permute.xlu0 %1130
        %v1134 = vadd.f32 %v1054, %v1129
        %v1135 = vadd.f32 %v1055, %v1131
        %v1136 = vstv %s332
        %v1137 = vmul.f32 %v1136, %v430
        %v1138 = vmul.f32 %v1136, %v431
        %v1139 = vmul.f32 %v1136, %v432
        %v1143 = vrot.slane %v1137, 5
        %v1144 = vrot.slane %v1138, 5
        %v1145 = vsel %vm389, %v1143, %v1144
        %v1146 = vrot.slane %v1139, 5
        %v1147 = vsel %vm389, %v1144, %v1146
        %1148 = vrot.lane.b32.xlu0 %v1145, 123
        %v1149 = vpop.permute.xlu0 %1148
        %1150 = vrot.lane.b32.xlu0 %v1147, 123
        %v1151 = vpop.permute.xlu0 %1150
        %v1154 = vadd.f32 %v1074, %v1149
        %v1155 = vadd.f32 %v1075, %v1151
        %v1156 = vstv %s333
        %v1157 = vmul.f32 %v1156, %v430
        %v1158 = vmul.f32 %v1156, %v431
        %v1159 = vmul.f32 %v1156, %v432
        %v1163 = vrot.slane %v1157, 5
        %v1164 = vrot.slane %v1158, 5
        %v1165 = vsel %vm389, %v1163, %v1164
        %v1166 = vrot.slane %v1159, 5
        %v1167 = vsel %vm389, %v1164, %v1166
        %1168 = vrot.lane.b32.xlu0 %v1165, 123
        %v1169 = vpop.permute.xlu0 %1168
        %1170 = vrot.lane.b32.xlu0 %v1167, 123
        %v1171 = vpop.permute.xlu0 %1170
        %v1174 = vadd.f32 %v1094, %v1169
        %v1175 = vadd.f32 %v1095, %v1171
        %v1176 = vstv %s334
        %v1177 = vmul.f32 %v1176, %v430
        %v1178 = vmul.f32 %v1176, %v431
        %v1179 = vmul.f32 %v1176, %v432
        %v1183 = vrot.slane %v1177, 6
        %v1184 = vrot.slane %v1178, 6
        %v1185 = vsel %vm387, %v1183, %v1184
        %v1186 = vrot.slane %v1179, 6
        %v1187 = vsel %vm387, %v1184, %v1186
        %1188 = vrot.lane.b32.xlu0 %v1185, 2
        %v1189 = vpop.permute.xlu0 %1188
        %1190 = vrot.lane.b32.xlu0 %v1187, 2
        %v1191 = vpop.permute.xlu0 %1190
        %v1194 = vadd.f32 %v1114, %v1189
        %v1195 = vadd.f32 %v1115, %v1191
        %v1196 = vstv %s335
        %v1197 = vmul.f32 %v1196, %v430
        %v1198 = vmul.f32 %v1196, %v431
        %v1199 = vmul.f32 %v1196, %v432
        %v1203 = vrot.slane %v1197, 6
        %v1204 = vrot.slane %v1198, 6
        %v1205 = vsel %vm387, %v1203, %v1204
        %v1206 = vrot.slane %v1199, 6
        %v1207 = vsel %vm387, %v1204, %v1206
        %1208 = vrot.lane.b32.xlu0 %v1205, 2
        %v1209 = vpop.permute.xlu0 %1208
        %1210 = vrot.lane.b32.xlu0 %v1207, 2
        %v1211 = vpop.permute.xlu0 %1210
        %v1214 = vadd.f32 %v1134, %v1209
        %v1215 = vadd.f32 %v1135, %v1211
        %v1216 = vstv %s336
        %v1217 = vmul.f32 %v1216, %v430
        %v1218 = vmul.f32 %v1216, %v431
        %v1219 = vmul.f32 %v1216, %v432
        %v1223 = vrot.slane %v1217, 6
        %v1224 = vrot.slane %v1218, 6
        %v1225 = vsel %vm387, %v1223, %v1224
        %v1226 = vrot.slane %v1219, 6
        %v1227 = vsel %vm387, %v1224, %v1226
        %1228 = vrot.lane.b32.xlu0 %v1225, 126
        %v1229 = vpop.permute.xlu0 %1228
        %1230 = vrot.lane.b32.xlu0 %v1227, 126
        %v1231 = vpop.permute.xlu0 %1230
        %v1234 = vadd.f32 %v1154, %v1229
        %v1235 = vadd.f32 %v1155, %v1231
        %v1236 = vstv %s337
        %v1237 = vmul.f32 %v1236, %v430
        %v1238 = vmul.f32 %v1236, %v431
        %v1239 = vmul.f32 %v1236, %v432
        %v1243 = vrot.slane %v1237, 6
        %v1244 = vrot.slane %v1238, 6
        %v1245 = vsel %vm387, %v1243, %v1244
        %v1246 = vrot.slane %v1239, 6
        %v1247 = vsel %vm387, %v1244, %v1246
        %1248 = vrot.lane.b32.xlu0 %v1245, 126
        %v1249 = vpop.permute.xlu0 %1248
        %1250 = vrot.lane.b32.xlu0 %v1247, 126
        %v1251 = vpop.permute.xlu0 %1250
        %v1254 = vadd.f32 %v1174, %v1249
        %v1255 = vadd.f32 %v1175, %v1251
        %v1256 = vstv %s338
        %v1257 = vmul.f32 %v1256, %v430
        %v1258 = vmul.f32 %v1256, %v431
        %v1259 = vmul.f32 %v1256, %v432
        %v1263 = vrot.slane %v1257, 6
        %v1264 = vrot.slane %v1258, 6
        %v1265 = vsel %vm387, %v1263, %v1264
        %v1266 = vrot.slane %v1259, 6
        %v1267 = vsel %vm387, %v1264, %v1266
        %1268 = vrot.lane.b32.xlu0 %v1265, 126
        %v1269 = vpop.permute.xlu0 %1268
        %1270 = vrot.lane.b32.xlu0 %v1267, 126
        %v1271 = vpop.permute.xlu0 %1270
        %v1274 = vadd.f32 %v1194, %v1269
        %v1275 = vadd.f32 %v1195, %v1271
        %v1276 = vstv %s339
        %v1277 = vmul.f32 %v1276, %v430
        %v1278 = vmul.f32 %v1276, %v431
        %v1279 = vmul.f32 %v1276, %v432
        %v1283 = vrot.slane %v1277, 6
        %v1284 = vrot.slane %v1278, 6
        %v1285 = vsel %vm387, %v1283, %v1284
        %v1286 = vrot.slane %v1279, 6
        %v1287 = vsel %vm387, %v1284, %v1286
        %1288 = vrot.lane.b32.xlu0 %v1285, 126
        %v1289 = vpop.permute.xlu0 %1288
        %1290 = vrot.lane.b32.xlu0 %v1287, 126
        %v1291 = vpop.permute.xlu0 %1290
        %v1294 = vadd.f32 %v1214, %v1289
        %v1295 = vadd.f32 %v1215, %v1291
        %v1296 = vstv %s340
        %v1297 = vmul.f32 %v1296, %v430
        %v1298 = vmul.f32 %v1296, %v431
        %v1299 = vmul.f32 %v1296, %v432
        %v1303 = vrot.slane %v1297, 6
        %v1304 = vrot.slane %v1298, 6
        %v1305 = vsel %vm387, %v1303, %v1304
        %v1306 = vrot.slane %v1299, 6
        %v1307 = vsel %vm387, %v1304, %v1306
        %1308 = vrot.lane.b32.xlu0 %v1305, 122
        %v1309 = vpop.permute.xlu0 %1308
        %1310 = vrot.lane.b32.xlu0 %v1307, 122
        %v1311 = vpop.permute.xlu0 %1310
        %v1314 = vadd.f32 %v1234, %v1309
        %v1315 = vadd.f32 %v1235, %v1311
        %1318 = vrot.lane.b32.xlu0 %v1254, 127
        %v1319 = vpop.permute.xlu0 %1318
        %1320 = vrot.lane.b32.xlu0 %v1255, 127
        %v1321 = vpop.permute.xlu0 %1320
        %v1324 = vadd.f32 %v1314, %v1319
        %v1325 = vadd.f32 %v1315, %v1321
        %1328 = vrot.lane.b32.xlu0 %v1294, 127
        %v1329 = vpop.permute.xlu0 %1328
        %1330 = vrot.lane.b32.xlu0 %v1295, 127
        %v1331 = vpop.permute.xlu0 %1330
        %v1334 = vadd.f32 %v1274, %v1329
        %v1335 = vadd.f32 %v1275, %v1331
        %1338 = vrot.lane.b32.xlu0 %v1334, 126
        %v1339 = vpop.permute.xlu0 %1338
        %1340 = vrot.lane.b32.xlu0 %v1335, 126
        %v1341 = vpop.permute.xlu0 %1340
        %v1344 = vadd.f32 %v1324, %v1339
        %v1345 = vadd.f32 %v1325, %v1341
        %v1346 = vxor.u32 %v1344, 2147483648
        %v1347 = vxor.u32 %v1345, 2147483648
        %v1348 = vmul.f32 %v1346, 1.442695
        %v1349 = vpow.pop %v1348
        %v1350 = vmul.f32 %v1347, 1.442695
        %v1351 = vpow.pop %v1350
        %v1352 = vadd.f32 %v1349, 1.0
        %v1353 = vadd.f32 %v1351, 1.0
        %v1354 = vrcp.pop %v1352
        %v1355 = vmul.f32 1.0, %v1354
        %v1356 = vrcp.pop %v1353
        %v1357 = vmul.f32 1.0, %v1356
        %v1359 = vrot.slane %v1355, 1
        %1360 = vrot.lane.b32.xlu0 %v1359, 16
        %v1361 = vpop.permute.xlu0 %1360
        %v1363 = vrot.slane %v1355, 2
        %1364 = vrot.lane.b32.xlu0 %v1363, 32
        %v1365 = vpop.permute.xlu0 %1364
        %v1367 = vrot.slane %v1355, 3
        %1368 = vrot.lane.b32.xlu0 %v1367, 48
        %v1369 = vpop.permute.xlu0 %1368
        %v1371 = vrot.slane %v1355, 4
        %1372 = vrot.lane.b32.xlu0 %v1371, 64
        %v1373 = vpop.permute.xlu0 %1372
        %v1375 = vrot.slane %v1355, 5
        %1376 = vrot.lane.b32.xlu0 %v1375, 80
        %v1377 = vpop.permute.xlu0 %1376
        %v1379 = vrot.slane %v1355, 6
        %1380 = vrot.lane.b32.xlu0 %v1379, 96
        %v1381 = vpop.permute.xlu0 %1380
        %v1383 = vrot.slane %v1355, 7
        %1384 = vrot.lane.b32.xlu0 %v1383, 112
        %v1385 = vpop.permute.xlu0 %1384
        %v1388 = vrot.slane %v1357, 1
        %1389 = vrot.lane.b32.xlu0 %v1388, 16
        %v1390 = vpop.permute.xlu0 %1389
        %v1392 = vrot.slane %v1357, 2
        %1393 = vrot.lane.b32.xlu0 %v1392, 32
        %v1394 = vpop.permute.xlu0 %1393
        %v1396 = vrot.slane %v1357, 3
        %1397 = vrot.lane.b32.xlu0 %v1396, 48
        %v1398 = vpop.permute.xlu0 %1397
        %v1400 = vrot.slane %v1357, 4
        %1401 = vrot.lane.b32.xlu0 %v1400, 64
        %v1402 = vpop.permute.xlu0 %1401
        %v1404 = vrot.slane %v1357, 5
        %1405 = vrot.lane.b32.xlu0 %v1404, 80
        %v1406 = vpop.permute.xlu0 %1405
        %v1408 = vrot.slane %v1357, 6
        %1409 = vrot.lane.b32.xlu0 %v1408, 96
        %v1410 = vpop.permute.xlu0 %1409
        %v1412 = vrot.slane %v1357, 7
        %1413 = vrot.lane.b32.xlu0 %v1412, 112
        %v1414 = vpop.permute.xlu0 %1413
        %vm1416 = vcmask 130048
        %v1417 = vsel %vm1416, %v1355, %v1361
        %vm1418 = vcmask 261120
        %v1419 = vsel %vm1418, %v1417, %v1365
        %vm1420 = vcmask 392192
        %v1421 = vsel %vm1420, %v1419, %v1369
        %vm1422 = vcmask 523264
        %v1423 = vsel %vm1422, %v1421, %v1373
        %vm1424 = vcmask 654336
        %v1425 = vsel %vm1424, %v1423, %v1377
        %vm1426 = vcmask 785408
        %v1427 = vsel %vm1426, %v1425, %v1381
        %vm1428 = vcmask 916480
        %v1429 = vsel %vm1428, %v1427, %v1385
        %v1430 = vsel %vm1416, %v1357, %v1390
        %v1431 = vsel %vm1418, %v1430, %v1394
        %v1432 = vsel %vm1420, %v1431, %v1398
        %v1433 = vsel %vm1422, %v1432, %v1402
        %v1434 = vsel %vm1424, %v1433, %v1406
        %v1435 = vsel %vm1426, %v1434, %v1410
        %v1436 = vsel %vm1428, %v1435, %v1414
        %v1437 = vlaneseq
        %v1438 = vshrl.u32 %v1437, 7
        %v1439 = vsub.s32 0, %v1438
        %v1440 = vrot.slane %v1429, %v1439
        %v1441 = vlaneseq
        %v1442 = vshrl.u32 %v1441, 7
        %v1443 = vsub.s32 0, %v1442
        %v1444 = vrot.slane %v1436, %v1443
        %v1447 = vcombine.low %v1440, %v1444
        %v1449 = vmul.f32 %v271, %v1447
        %1450 = vst [vmem:[%s227] sm:$0xff] %v1449
        %s1451 = sand.u32 %s119, 1
        %s1452 = scalar_lea.sflag [#allocation4], %s1451
        %s1453 = sand.u32 %s119, 1
        %s1454 = smul.addr %s1453, 8
        %s1455 = scalar_lea.vmem [#allocation7], %s1454
        // Predicated region
        $region45: #{tpu_custom_call.1} parent=35 // pred_check
          %p1456 = pneg %p129
        $region46: #{tpu_custom_call.1} parent=35 // pred_check_branch
          %1458 = sbr.rel (%p1456) target = $region48
        $region47: #{tpu_custom_call.1} parent=35 // pred_region
          %s1460 = ssub.s32 128, 128
          %1461 = vsyncadd %s1452, %s1460
          %s1462 = smul.addr %s22, 2
          %s1463 = smul.addr %s1462, 64
          %s1464 = scalar_lea.hbm %s4, %s1463
          %s1466 = sshll.u32 %s1455, 4
          %s1467 = int_to_ptr.vmem [resolvable:$true] %s1466
          %1469 = dma.vmem_to_hbm [thread:$0]  %s1467, 128, %s1464, %s1452
        $region48: #{tpu_custom_call.1} parent=35 // pred_fallthru
          _
      $region36: #{tpu_custom_call.1} parent=5 // pred_fallthru
        _
      %p1470 = scmp.le.s32.totalorder 2, %s17
      // Predicated region
      $region49: #{tpu_custom_call.1} parent=5 // pred_check
        %p1471 = pneg %p1470
      $region50: #{tpu_custom_call.1} parent=5 // pred_check_branch
        %1473 = sbr.rel (%p1471) target = $region52
      $region51: #{tpu_custom_call.1} parent=5 // pred_region
        %s1474 = ssub.s32 %s17, 2
        // Predicated region
        $region53: #{tpu_custom_call.1} parent=51 // pred_check
          %p1475 = pneg %p135
        $region54: #{tpu_custom_call.1} parent=51 // pred_check_branch
          %1477 = sbr.rel (%p1475) target = $region56
        $region55: #{tpu_custom_call.1} parent=51 // pred_region
          %s1478 = sand.u32 %s120, 1
          %s1479 = scalar_lea.sflag [#allocation4], %s1478
          %s1480 = sand.u32 %s120, 1
          %s1481 = smul.addr %s1480, 8
          %s1482 = scalar_lea.vmem [#allocation7], %s1481
          %1483 = dma.done %s1479, 128
        $region56: #{tpu_custom_call.1} parent=51 // pred_fallthru
          _
      $region52: #{tpu_custom_call.1} parent=5 // pred_fallthru
        _
    $region6: #{tpu_custom_call.1} parent=1 // loop_footer
      %s21 = sadd.s32 1, %s17
    $region7: #{tpu_custom_call.1} parent=1 // loop_footer_branch
      %16 = sbr.rel target = $region3
    $region8: #{tpu_custom_call.1} parent=1 // loop_exit
      _
    %1484 = vsyncpa [#allocation3], 1
    %s1485 = scalar_lea.sflag [#allocation3], 1
    %1486 = vsyncpa %s1485, 1
    %1487 = vsyncpa [#allocation4], 1
    %s1488 = scalar_lea.sflag [#allocation4], 1
    %1489 = vsyncpa %s1488, 1
    %1490 = vsyncpa [#allocation5], 1
    %s1491 = scalar_lea.sflag [#allocation5], 1
    %1492 = vsyncpa %s1491, 1

</llo_original>
